<compile_context>
chip_gen: v7x
topology: tpu7x:2x2x1
jax: 0.10.0
libtpu: 0.0.40
codegen_flags: <defaults>
</compile_context>

<pallas_src>
import jax
import jax.numpy as jnp
from jax import lax
from jax.experimental import pallas as pl
from jax.experimental.pallas import tpu as pltpu

T_STEPS = 8
T0, T1 = 0.0, 1.0


def cnf_fused_kernel(state_in_ref, w1_ref, tbb_ref, w2dt_ref, diagdt_ref,
                     crow_ref, ed_ref, state_ref):
    """One grid step = one CNF ODE block.

    State slab layout: lanes [0, D) = z, lane D = logp, lanes > D = zero pad.
    The state lives in the (VMEM-resident) output block across grid steps.
    """
    @pl.when(pl.program_id(0) == 0)
    def _():
        state_ref[...] = state_in_ref[...]

    w1 = w1_ref[...]          # [SP, HP]  (rows >= D are zero)
    w2dt = w2dt_ref[...]      # [HP, SP]  dt * W2 (cols >= D are zero)
    diagdt = diagdt_ref[...]  # [BP, HP]  dt * diag, pre-broadcast over batch
    crow = crow_ref[...]      # [BP, SP]  dt * b2 in lanes < D, zero elsewhere
    ed = ed_ref[...]          # [BP, SP]  one-hot at lane D (logp lane)

    def step(k, s):
        # a = z @ W1 + t_k * wt + b1   (time/bias table precomputed per step)
        a = jnp.dot(s, w1, preferred_element_type=jnp.float32) + tbb_ref[k]
        h = jnp.tanh(a)
        # dt * trace(df/dz) = sum_h (1 - h^2) * (dt * sum_d W1[d,h] W2[h,d])
        tr = jnp.sum((1.0 - h * h) * diagdt, axis=-1, keepdims=True)  # [BP,1]
        # z      += dt * (h @ W2 + b2)        (lanes < D)
        # logp   += -dt * trace               (lane D, via one-hot `ed`)
        return (s + jnp.dot(h, w2dt, preferred_element_type=jnp.float32)
                + crow - tr * ed)

    state_ref[...] = lax.fori_loop(0, T_STEPS, step, state_ref[...],
                                   unroll=True)


def _round_up(x, m):
    return ((x + m - 1) // m) * m


@jax.jit
def _cnf_forward(x, logp_diff_t1, params_list):
    """All N_ODE blocks in one pallas_call; returns (z, logp)."""
    B, D = x.shape
    H = params_list[0]["w1"].shape[1]
    n_ode = len(params_list)

    BP = _round_up(B, 8)                 # sublane padding
    SP = _round_up(D + 1, 128)           # state slab lanes: z | logp | pad
    HP = _round_up(H, 128)               # hidden lanes
    dt = (T1 - T0) / T_STEPS
    ts = T0 + dt * jnp.arange(T_STEPS, dtype=jnp.float32)          # [T]

    def pack(p):
        # W1 padded: only rows < D (z lanes) and cols < H are nonzero.
        w1p = jnp.zeros((SP, HP), jnp.float32).at[:D, :H].set(p["w1"])
        # Per-step bias table t_k*wt + b1, pre-broadcast over batch.
        tb = ts[:, None] * p["wt"] + p["b1"]                        # [T, H]
        tbb = jnp.zeros((T_STEPS, BP, HP), jnp.float32).at[:, :, :H].set(
            jnp.broadcast_to(tb[:, None, :], (T_STEPS, BP, H)))
        # dt folded into W2 / b2 / diag (dt = 1/8 is exact in fp32).
        w2p = jnp.zeros((HP, SP), jnp.float32).at[:H, :D].set(dt * p["w2"])
        diag = dt * jnp.sum(p["w1"] * p["w2"].T, axis=0)            # [H]
        diagb = jnp.zeros((BP, HP), jnp.float32).at[:, :H].set(
            jnp.broadcast_to(diag[None, :], (BP, H)))
        crow = jnp.zeros((BP, SP), jnp.float32).at[:, :D].set(
            jnp.broadcast_to(dt * p["b2"], (BP, D)))
        return w1p, tbb, w2p, diagb, crow

    packed = [pack(p) for p in params_list]
    w1s = jnp.stack([q[0] for q in packed])       # [N, SP, HP]
    tbbs = jnp.stack([q[1] for q in packed])      # [N, T, BP, HP]
    w2s = jnp.stack([q[2] for q in packed])       # [N, HP, SP]
    dgs = jnp.stack([q[3] for q in packed])       # [N, BP, HP]
    crs = jnp.stack([q[4] for q in packed])       # [N, BP, SP]

    # Initial state slab: z in lanes [0, D), logp in lane D, rest zero.
    state0 = jnp.zeros((BP, SP), jnp.float32)
    state0 = state0.at[:B, :D].set(x).at[:B, D].set(logp_diff_t1[:, 0])
    ed = jnp.zeros((BP, SP), jnp.float32).at[:, D].set(1.0)

    out = pl.pallas_call(
        cnf_fused_kernel,
        out_shape=jax.ShapeDtypeStruct((BP, SP), jnp.float32),
        grid_spec=pltpu.PrefetchScalarGridSpec(
            num_scalar_prefetch=0,
            grid=(n_ode,),
            in_specs=[
                pl.BlockSpec((BP, SP), lambda i: (0, 0)),                  # state0
                pl.BlockSpec((None, SP, HP), lambda i: (i, 0, 0)),         # W1
                pl.BlockSpec((None, T_STEPS, BP, HP),
                             lambda i: (i, 0, 0, 0)),                      # t*wt+b1
                pl.BlockSpec((None, HP, SP), lambda i: (i, 0, 0)),         # dt*W2
                pl.BlockSpec((None, BP, HP), lambda i: (i, 0, 0)),         # dt*diag
                pl.BlockSpec((None, BP, SP), lambda i: (i, 0, 0)),         # dt*b2
                pl.BlockSpec((BP, SP), lambda i: (0, 0)),                  # one-hot
            ],
            out_specs=pl.BlockSpec((BP, SP), lambda i: (0, 0)),
        ),
        compiler_params=pltpu.CompilerParams(
            dimension_semantics=("arbitrary",)),
    )(state0, w1s, tbbs, w2s, dgs, crs, ed)

    return out[:B, :D], out[:B, D:D + 1]


def cnf_ode_net(x, logp_diff_t1, params_list):
    """Forward of CNFODENet: chain of n_ode CNF blocks (fused, one kernel)."""
    z, logp = _cnf_forward(x, logp_diff_t1, params_list)
    return [z, logp]


# ---------------- pure-JAX reference for correctness check ----------------
def _ref_block(z, logp, p):
    dt = (T1 - T0) / T_STEPS
    diag = jnp.sum(p["w1"] * p["w2"].T, axis=0, keepdims=True)
    for k in range(T_STEPS):
        t = T0 + dt * k
        h = jnp.tanh(z @ p["w1"] + t * p["wt"] + p["b1"])
        dz = h @ p["w2"] + p["b2"]
        trace = jnp.sum((1.0 - h * h) * diag, axis=-1, keepdims=True)
        z = z + dt * dz
        logp = logp + dt * (-trace)
    return z, logp


def _ref_net(x, logp, params_list):
    for p in params_list:
        x, logp = _ref_block(x, logp, p)
    return [x, logp]


# ---------------- deterministic parameter construction ----------------
def make_ode_params(key, dim, hidden):
    k1, k2, k3, k4, k5 = jax.random.split(key, 5)
    return dict(
        w1=jax.random.normal(k1, (dim, hidden), jnp.float32) / jnp.sqrt(dim),
        b1=jax.random.normal(k2, (1, hidden), jnp.float32) * 0.1,
        wt=jax.random.normal(k3, (1, hidden), jnp.float32) * 0.1,
        w2=jax.random.normal(k4, (hidden, dim), jnp.float32) / jnp.sqrt(hidden),
        b2=jax.random.normal(k5, (1, dim), jnp.float32) * 0.1,
    )


if __name__ == "__main__":
    B, D, H = 8, 4, 32      # batch, CNF state dim, odefunc hidden width
    N_ODE = 2               # n_ode chained CNF blocks

    key = jax.random.PRNGKey(0)
    kx, kparams = jax.random.split(key, 2)
    x = jax.random.normal(kx, (B, D), jnp.float32)
    logp_diff_t1 = jnp.zeros((B, 1), jnp.float32)

    params_list = [make_ode_params(k, D, H)
                   for k in jax.random.split(kparams, N_ODE)]

    out = cnf_ode_net(x, logp_diff_t1, params_list)
    out = jax.block_until_ready(out)

    ref = _ref_net(x, logp_diff_t1, params_list)
    assert jnp.allclose(out[0], ref[0], atol=1e-5, rtol=1e-5)
    assert jnp.allclose(out[1], ref[1], atol=1e-5, rtol=1e-5)

    print("KERNEL_OK")
</pallas_src>

<mosaic_0001>
module attributes {stable_mosaic.version = 11 : i64} {
  func.func @cnf_fused_kernel(%arg0: i32, %arg1: memref<8x128xf32, #tpu.memory_space<vmem>>, %arg2: memref<1x128x128xf32, #tpu.memory_space<vmem>>, %arg3: memref<1x8x8x128xf32, #tpu.memory_space<vmem>>, %arg4: memref<1x128x128xf32, #tpu.memory_space<vmem>>, %arg5: memref<1x8x128xf32, #tpu.memory_space<vmem>>, %arg6: memref<1x8x128xf32, #tpu.memory_space<vmem>>, %arg7: memref<8x128xf32, #tpu.memory_space<vmem>>, %arg8: memref<8x128xf32, #tpu.memory_space<vmem>>) attributes {dimension_semantics = [#tpu.dimension_semantics<arbitrary>], iteration_bounds = array<i64: 2>, scalar_prefetch = 0 : i64, scratch_operands = 0 : i64, tpu.core_type = #tpu.core_type<tc>, window_params = [{pipeline_mode = #tpu.pipeline_mode<synchronous>, transform_indices = @transform_0, window_bounds = array<i64: 8, 128>}, {transform_indices = @transform_1, window_bounds = array<i64: 1, 128, 128>}, {transform_indices = @transform_2, window_bounds = array<i64: 1, 8, 8, 128>}, {transform_indices = @transform_3, window_bounds = array<i64: 1, 128, 128>}, {transform_indices = @transform_4, window_bounds = array<i64: 1, 8, 128>}, {transform_indices = @transform_5, window_bounds = array<i64: 1, 8, 128>}, {pipeline_mode = #tpu.pipeline_mode<synchronous>, transform_indices = @transform_6, window_bounds = array<i64: 8, 128>}, {pipeline_mode = #tpu.pipeline_mode<synchronous>, transform_indices = @transform_7, window_bounds = array<i64: 8, 128>}]} {
    %c0_i32 = arith.constant 0 : i32
    %0 = arith.cmpi eq, %arg0, %c0_i32 : i32
    %1 = arith.extui %0 : i1 to i32
    %c0_i32_0 = arith.constant 0 : i32
    %2 = arith.cmpi ne, %1, %c0_i32_0 : i32
    scf.if %2 {
      %c0_74 = arith.constant 0 : index
      %c0_75 = arith.constant 0 : index
      %158 = vector.load %arg1[%c0_74, %c0_75] : memref<8x128xf32, #tpu.memory_space<vmem>>, vector<8x128xf32>
      %c0_76 = arith.constant 0 : index
      %c0_77 = arith.constant 0 : index
      %159 = vector.load %arg8[%c0_76, %c0_77] : memref<8x128xf32, #tpu.memory_space<vmem>>, vector<8x128xf32>
      tpu.vector_store %arg8[%c0_76, %c0_77], %158 {strides = array<i32>} : memref<8x128xf32, #tpu.memory_space<vmem>>, vector<8x128xf32>,
    } else {
    }
    %c0 = arith.constant 0 : index
    %c0_1 = arith.constant 0 : index
    %c0_2 = arith.constant 0 : index
    %3 = vector.load %arg2[%c0, %c0_1, %c0_2] : memref<1x128x128xf32, #tpu.memory_space<vmem>>, vector<1x128x128xf32>
    %4 = vector.shape_cast %3 : vector<1x128x128xf32> to vector<128x128xf32>
    %c0_3 = arith.constant 0 : index
    %c0_4 = arith.constant 0 : index
    %c0_5 = arith.constant 0 : index
    %5 = vector.load %arg4[%c0_3, %c0_4, %c0_5] : memref<1x128x128xf32, #tpu.memory_space<vmem>>, vector<1x128x128xf32>
    %6 = vector.shape_cast %5 : vector<1x128x128xf32> to vector<128x128xf32>
    %c0_6 = arith.constant 0 : index
    %c0_7 = arith.constant 0 : index
    %c0_8 = arith.constant 0 : index
    %7 = vector.load %arg5[%c0_6, %c0_7, %c0_8] : memref<1x8x128xf32, #tpu.memory_space<vmem>>, vector<1x8x128xf32>
    %8 = vector.shape_cast %7 : vector<1x8x128xf32> to vector<8x128xf32>
    %c0_9 = arith.constant 0 : index
    %c0_10 = arith.constant 0 : index
    %c0_11 = arith.constant 0 : index
    %9 = vector.load %arg6[%c0_9, %c0_10, %c0_11] : memref<1x8x128xf32, #tpu.memory_space<vmem>>, vector<1x8x128xf32>
    %10 = vector.shape_cast %9 : vector<1x8x128xf32> to vector<8x128xf32>
    %c0_12 = arith.constant 0 : index
    %c0_13 = arith.constant 0 : index
    %11 = vector.load %arg7[%c0_12, %c0_13] : memref<8x128xf32, #tpu.memory_space<vmem>>, vector<8x128xf32>
    %c0_14 = arith.constant 0 : index
    %c0_15 = arith.constant 0 : index
    %12 = vector.load %arg8[%c0_14, %c0_15] : memref<8x128xf32, #tpu.memory_space<vmem>>, vector<8x128xf32>
    %c0_i32_16 = arith.constant 0 : i32
    %cst = arith.constant dense<0.000000e+00> : vector<8x128xf32>
    %13 = tpu.matmul %12, %4, %cst {dimension_numbers = #tpu.dot_dimension_numbers<[1], [0], [0], [1], [0, 0, 1, 1], [], []>} : vector<8x128xf32>, vector<128x128xf32>, vector<8x128xf32> -> vector<8x128xf32>
    %c0_17 = arith.constant 0 : index
    %14 = arith.index_cast %c0_i32_16 : i32 to index
    %c0_18 = arith.constant 0 : index
    %c0_19 = arith.constant 0 : index
    %15 = vector.load %arg3[%c0_17, %14, %c0_18, %c0_19] : memref<1x8x8x128xf32, #tpu.memory_space<vmem>>, vector<1x1x8x128xf32>
    %16 = vector.shape_cast %15 : vector<1x1x8x128xf32> to vector<8x128xf32>
    %17 = arith.addf %13, %16 : vector<8x128xf32>
    %18 = math.tanh %17 : vector<8x128xf32>
    %19 = arith.mulf %18, %18 : vector<8x128xf32>
    %cst_20 = arith.constant 1.000000e+00 : f32
    %20 = vector.broadcast %cst_20 : f32 to vector<8x128xf32>
    %21 = arith.subf %20, %19 : vector<8x128xf32>
    %22 = arith.mulf %21, %8 : vector<8x128xf32>
    %cst_21 = arith.constant dense<0.000000e+00> : vector<8xf32>
    %23 = vector.multi_reduction <add>, %22, %cst_21 [1] : vector<8x128xf32> to vector<8xf32>
    %24 = vector.shape_cast %23 : vector<8xf32> to vector<8x1xf32>
    %cst_22 = arith.constant dense<0.000000e+00> : vector<8x128xf32>
    %25 = tpu.matmul %18, %6, %cst_22 {dimension_numbers = #tpu.dot_dimension_numbers<[1], [0], [0], [1], [0, 0, 1, 1], [], []>} : vector<8x128xf32>, vector<128x128xf32>, vector<8x128xf32> -> vector<8x128xf32>
    %26 = arith.addf %12, %25 : vector<8x128xf32>
    %27 = arith.addf %26, %10 : vector<8x128xf32>
    %28 = vector.broadcast %24 : vector<8x1xf32> to vector<8x128xf32>
    %29 = arith.mulf %28, %11 : vector<8x128xf32>
    %30 = arith.subf %27, %29 : vector<8x128xf32>
    %c1_i32 = arith.constant 1 : i32
    %cst_23 = arith.constant dense<0.000000e+00> : vector<8x128xf32>
    %31 = tpu.matmul %30, %4, %cst_23 {dimension_numbers = #tpu.dot_dimension_numbers<[1], [0], [0], [1], [0, 0, 1, 1], [], []>} : vector<8x128xf32>, vector<128x128xf32>, vector<8x128xf32> -> vector<8x128xf32>
    %c0_24 = arith.constant 0 : index
    %32 = arith.index_cast %c1_i32 : i32 to index
    %c0_25 = arith.constant 0 : index
    %c0_26 = arith.constant 0 : index
    %33 = vector.load %arg3[%c0_24, %32, %c0_25, %c0_26] : memref<1x8x8x128xf32, #tpu.memory_space<vmem>>, vector<1x1x8x128xf32>
    %34 = vector.shape_cast %33 : vector<1x1x8x128xf32> to vector<8x128xf32>
    %35 = arith.addf %31, %34 : vector<8x128xf32>
    %36 = math.tanh %35 : vector<8x128xf32>
    %37 = arith.mulf %36, %36 : vector<8x128xf32>
    %cst_27 = arith.constant 1.000000e+00 : f32
    %38 = vector.broadcast %cst_27 : f32 to vector<8x128xf32>
    %39 = arith.subf %38, %37 : vector<8x128xf32>
    %40 = arith.mulf %39, %8 : vector<8x128xf32>
    %cst_28 = arith.constant dense<0.000000e+00> : vector<8xf32>
    %41 = vector.multi_reduction <add>, %40, %cst_28 [1] : vector<8x128xf32> to vector<8xf32>
    %42 = vector.shape_cast %41 : vector<8xf32> to vector<8x1xf32>
    %cst_29 = arith.constant dense<0.000000e+00> : vector<8x128xf32>
    %43 = tpu.matmul %36, %6, %cst_29 {dimension_numbers = #tpu.dot_dimension_numbers<[1], [0], [0], [1], [0, 0, 1, 1], [], []>} : vector<8x128xf32>, vector<128x128xf32>, vector<8x128xf32> -> vector<8x128xf32>
    %44 = arith.addf %30, %43 : vector<8x128xf32>
    %45 = arith.addf %44, %10 : vector<8x128xf32>
    %46 = vector.broadcast %42 : vector<8x1xf32> to vector<8x128xf32>
    %47 = arith.mulf %46, %11 : vector<8x128xf32>
    %48 = arith.subf %45, %47 : vector<8x128xf32>
    %c2_i32 = arith.constant 2 : i32
    %cst_30 = arith.constant dense<0.000000e+00> : vector<8x128xf32>
    %49 = tpu.matmul %48, %4, %cst_30 {dimension_numbers = #tpu.dot_dimension_numbers<[1], [0], [0], [1], [0, 0, 1, 1], [], []>} : vector<8x128xf32>, vector<128x128xf32>, vector<8x128xf32> -> vector<8x128xf32>
    %c0_31 = arith.constant 0 : index
    %50 = arith.index_cast %c2_i32 : i32 to index
    %c0_32 = arith.constant 0 : index
    %c0_33 = arith.constant 0 : index
    %51 = vector.load %arg3[%c0_31, %50, %c0_32, %c0_33] : memref<1x8x8x128xf32, #tpu.memory_space<vmem>>, vector<1x1x8x128xf32>
    %52 = vector.shape_cast %51 : vector<1x1x8x128xf32> to vector<8x128xf32>
    %53 = arith.addf %49, %52 : vector<8x128xf32>
    %54 = math.tanh %53 : vector<8x128xf32>
    %55 = arith.mulf %54, %54 : vector<8x128xf32>
    %cst_34 = arith.constant 1.000000e+00 : f32
    %56 = vector.broadcast %cst_34 : f32 to vector<8x128xf32>
    %57 = arith.subf %56, %55 : vector<8x128xf32>
    %58 = arith.mulf %57, %8 : vector<8x128xf32>
    %cst_35 = arith.constant dense<0.000000e+00> : vector<8xf32>
    %59 = vector.multi_reduction <add>, %58, %cst_35 [1] : vector<8x128xf32> to vector<8xf32>
    %60 = vector.shape_cast %59 : vector<8xf32> to vector<8x1xf32>
    %cst_36 = arith.constant dense<0.000000e+00> : vector<8x128xf32>
    %61 = tpu.matmul %54, %6, %cst_36 {dimension_numbers = #tpu.dot_dimension_numbers<[1], [0], [0], [1], [0, 0, 1, 1], [], []>} : vector<8x128xf32>, vector<128x128xf32>, vector<8x128xf32> -> vector<8x128xf32>
    %62 = arith.addf %48, %61 : vector<8x128xf32>
    %63 = arith.addf %62, %10 : vector<8x128xf32>
    %64 = vector.broadcast %60 : vector<8x1xf32> to vector<8x128xf32>
    %65 = arith.mulf %64, %11 : vector<8x128xf32>
    %66 = arith.subf %63, %65 : vector<8x128xf32>
    %c3_i32 = arith.constant 3 : i32
    %cst_37 = arith.constant dense<0.000000e+00> : vector<8x128xf32>
    %67 = tpu.matmul %66, %4, %cst_37 {dimension_numbers = #tpu.dot_dimension_numbers<[1], [0], [0], [1], [0, 0, 1, 1], [], []>} : vector<8x128xf32>, vector<128x128xf32>, vector<8x128xf32> -> vector<8x128xf32>
    %c0_38 = arith.constant 0 : index
    %68 = arith.index_cast %c3_i32 : i32 to index
    %c0_39 = arith.constant 0 : index
    %c0_40 = arith.constant 0 : index
    %69 = vector.load %arg3[%c0_38, %68, %c0_39, %c0_40] : memref<1x8x8x128xf32, #tpu.memory_space<vmem>>, vector<1x1x8x128xf32>
    %70 = vector.shape_cast %69 : vector<1x1x8x128xf32> to vector<8x128xf32>
    %71 = arith.addf %67, %70 : vector<8x128xf32>
    %72 = math.tanh %71 : vector<8x128xf32>
    %73 = arith.mulf %72, %72 : vector<8x128xf32>
    %cst_41 = arith.constant 1.000000e+00 : f32
    %74 = vector.broadcast %cst_41 : f32 to vector<8x128xf32>
    %75 = arith.subf %74, %73 : vector<8x128xf32>
    %76 = arith.mulf %75, %8 : vector<8x128xf32>
    %cst_42 = arith.constant dense<0.000000e+00> : vector<8xf32>
    %77 = vector.multi_reduction <add>, %76, %cst_42 [1] : vector<8x128xf32> to vector<8xf32>
    %78 = vector.shape_cast %77 : vector<8xf32> to vector<8x1xf32>
    %cst_43 = arith.constant dense<0.000000e+00> : vector<8x128xf32>
    %79 = tpu.matmul %72, %6, %cst_43 {dimension_numbers = #tpu.dot_dimension_numbers<[1], [0], [0], [1], [0, 0, 1, 1], [], []>} : vector<8x128xf32>, vector<128x128xf32>, vector<8x128xf32> -> vector<8x128xf32>
    %80 = arith.addf %66, %79 : vector<8x128xf32>
    %81 = arith.addf %80, %10 : vector<8x128xf32>
    %82 = vector.broadcast %78 : vector<8x1xf32> to vector<8x128xf32>
    %83 = arith.mulf %82, %11 : vector<8x128xf32>
    %84 = arith.subf %81, %83 : vector<8x128xf32>
    %c4_i32 = arith.constant 4 : i32
    %cst_44 = arith.constant dense<0.000000e+00> : vector<8x128xf32>
    %85 = tpu.matmul %84, %4, %cst_44 {dimension_numbers = #tpu.dot_dimension_numbers<[1], [0], [0], [1], [0, 0, 1, 1], [], []>} : vector<8x128xf32>, vector<128x128xf32>, vector<8x128xf32> -> vector<8x128xf32>
    %c0_45 = arith.constant 0 : index
    %86 = arith.index_cast %c4_i32 : i32 to index
    %c0_46 = arith.constant 0 : index
    %c0_47 = arith.constant 0 : index
    %87 = vector.load %arg3[%c0_45, %86, %c0_46, %c0_47] : memref<1x8x8x128xf32, #tpu.memory_space<vmem>>, vector<1x1x8x128xf32>
    %88 = vector.shape_cast %87 : vector<1x1x8x128xf32> to vector<8x128xf32>
    %89 = arith.addf %85, %88 : vector<8x128xf32>
    %90 = math.tanh %89 : vector<8x128xf32>
    %91 = arith.mulf %90, %90 : vector<8x128xf32>
    %cst_48 = arith.constant 1.000000e+00 : f32
    %92 = vector.broadcast %cst_48 : f32 to vector<8x128xf32>
    %93 = arith.subf %92, %91 : vector<8x128xf32>
    %94 = arith.mulf %93, %8 : vector<8x128xf32>
    %cst_49 = arith.constant dense<0.000000e+00> : vector<8xf32>
    %95 = vector.multi_reduction <add>, %94, %cst_49 [1] : vector<8x128xf32> to vector<8xf32>
    %96 = vector.shape_cast %95 : vector<8xf32> to vector<8x1xf32>
    %cst_50 = arith.constant dense<0.000000e+00> : vector<8x128xf32>
    %97 = tpu.matmul %90, %6, %cst_50 {dimension_numbers = #tpu.dot_dimension_numbers<[1], [0], [0], [1], [0, 0, 1, 1], [], []>} : vector<8x128xf32>, vector<128x128xf32>, vector<8x128xf32> -> vector<8x128xf32>
    %98 = arith.addf %84, %97 : vector<8x128xf32>
    %99 = arith.addf %98, %10 : vector<8x128xf32>
    %100 = vector.broadcast %96 : vector<8x1xf32> to vector<8x128xf32>
    %101 = arith.mulf %100, %11 : vector<8x128xf32>
    %102 = arith.subf %99, %101 : vector<8x128xf32>
    %c5_i32 = arith.constant 5 : i32
    %cst_51 = arith.constant dense<0.000000e+00> : vector<8x128xf32>
    %103 = tpu.matmul %102, %4, %cst_51 {dimension_numbers = #tpu.dot_dimension_numbers<[1], [0], [0], [1], [0, 0, 1, 1], [], []>} : vector<8x128xf32>, vector<128x128xf32>, vector<8x128xf32> -> vector<8x128xf32>
    %c0_52 = arith.constant 0 : index
    %104 = arith.index_cast %c5_i32 : i32 to index
    %c0_53 = arith.constant 0 : index
    %c0_54 = arith.constant 0 : index
    %105 = vector.load %arg3[%c0_52, %104, %c0_53, %c0_54] : memref<1x8x8x128xf32, #tpu.memory_space<vmem>>, vector<1x1x8x128xf32>
    %106 = vector.shape_cast %105 : vector<1x1x8x128xf32> to vector<8x128xf32>
    %107 = arith.addf %103, %106 : vector<8x128xf32>
    %108 = math.tanh %107 : vector<8x128xf32>
    %109 = arith.mulf %108, %108 : vector<8x128xf32>
    %cst_55 = arith.constant 1.000000e+00 : f32
    %110 = vector.broadcast %cst_55 : f32 to vector<8x128xf32>
    %111 = arith.subf %110, %109 : vector<8x128xf32>
    %112 = arith.mulf %111, %8 : vector<8x128xf32>
    %cst_56 = arith.constant dense<0.000000e+00> : vector<8xf32>
    %113 = vector.multi_reduction <add>, %112, %cst_56 [1] : vector<8x128xf32> to vector<8xf32>
    %114 = vector.shape_cast %113 : vector<8xf32> to vector<8x1xf32>
    %cst_57 = arith.constant dense<0.000000e+00> : vector<8x128xf32>
    %115 = tpu.matmul %108, %6, %cst_57 {dimension_numbers = #tpu.dot_dimension_numbers<[1], [0], [0], [1], [0, 0, 1, 1], [], []>} : vector<8x128xf32>, vector<128x128xf32>, vector<8x128xf32> -> vector<8x128xf32>
    %116 = arith.addf %102, %115 : vector<8x128xf32>
    %117 = arith.addf %116, %10 : vector<8x128xf32>
    %118 = vector.broadcast %114 : vector<8x1xf32> to vector<8x128xf32>
    %119 = arith.mulf %118, %11 : vector<8x128xf32>
    %120 = arith.subf %117, %119 : vector<8x128xf32>
    %c6_i32 = arith.constant 6 : i32
    %cst_58 = arith.constant dense<0.000000e+00> : vector<8x128xf32>
    %121 = tpu.matmul %120, %4, %cst_58 {dimension_numbers = #tpu.dot_dimension_numbers<[1], [0], [0], [1], [0, 0, 1, 1], [], []>} : vector<8x128xf32>, vector<128x128xf32>, vector<8x128xf32> -> vector<8x128xf32>
    %c0_59 = arith.constant 0 : index
    %122 = arith.index_cast %c6_i32 : i32 to index
    %c0_60 = arith.constant 0 : index
    %c0_61 = arith.constant 0 : index
    %123 = vector.load %arg3[%c0_59, %122, %c0_60, %c0_61] : memref<1x8x8x128xf32, #tpu.memory_space<vmem>>, vector<1x1x8x128xf32>
    %124 = vector.shape_cast %123 : vector<1x1x8x128xf32> to vector<8x128xf32>
    %125 = arith.addf %121, %124 : vector<8x128xf32>
    %126 = math.tanh %125 : vector<8x128xf32>
    %127 = arith.mulf %126, %126 : vector<8x128xf32>
    %cst_62 = arith.constant 1.000000e+00 : f32
    %128 = vector.broadcast %cst_62 : f32 to vector<8x128xf32>
    %129 = arith.subf %128, %127 : vector<8x128xf32>
    %130 = arith.mulf %129, %8 : vector<8x128xf32>
    %cst_63 = arith.constant dense<0.000000e+00> : vector<8xf32>
    %131 = vector.multi_reduction <add>, %130, %cst_63 [1] : vector<8x128xf32> to vector<8xf32>
    %132 = vector.shape_cast %131 : vector<8xf32> to vector<8x1xf32>
    %cst_64 = arith.constant dense<0.000000e+00> : vector<8x128xf32>
    %133 = tpu.matmul %126, %6, %cst_64 {dimension_numbers = #tpu.dot_dimension_numbers<[1], [0], [0], [1], [0, 0, 1, 1], [], []>} : vector<8x128xf32>, vector<128x128xf32>, vector<8x128xf32> -> vector<8x128xf32>
    %134 = arith.addf %120, %133 : vector<8x128xf32>
    %135 = arith.addf %134, %10 : vector<8x128xf32>
    %136 = vector.broadcast %132 : vector<8x1xf32> to vector<8x128xf32>
    %137 = arith.mulf %136, %11 : vector<8x128xf32>
    %138 = arith.subf %135, %137 : vector<8x128xf32>
    %c7_i32 = arith.constant 7 : i32
    %cst_65 = arith.constant dense<0.000000e+00> : vector<8x128xf32>
    %139 = tpu.matmul %138, %4, %cst_65 {dimension_numbers = #tpu.dot_dimension_numbers<[1], [0], [0], [1], [0, 0, 1, 1], [], []>} : vector<8x128xf32>, vector<128x128xf32>, vector<8x128xf32> -> vector<8x128xf32>
    %c0_66 = arith.constant 0 : index
    %140 = arith.index_cast %c7_i32 : i32 to index
    %c0_67 = arith.constant 0 : index
    %c0_68 = arith.constant 0 : index
    %141 = vector.load %arg3[%c0_66, %140, %c0_67, %c0_68] : memref<1x8x8x128xf32, #tpu.memory_space<vmem>>, vector<1x1x8x128xf32>
    %142 = vector.shape_cast %141 : vector<1x1x8x128xf32> to vector<8x128xf32>
    %143 = arith.addf %139, %142 : vector<8x128xf32>
    %144 = math.tanh %143 : vector<8x128xf32>
    %145 = arith.mulf %144, %144 : vector<8x128xf32>
    %cst_69 = arith.constant 1.000000e+00 : f32
    %146 = vector.broadcast %cst_69 : f32 to vector<8x128xf32>
    %147 = arith.subf %146, %145 : vector<8x128xf32>
    %148 = arith.mulf %147, %8 : vector<8x128xf32>
    %cst_70 = arith.constant dense<0.000000e+00> : vector<8xf32>
    %149 = vector.multi_reduction <add>, %148, %cst_70 [1] : vector<8x128xf32> to vector<8xf32>
    %150 = vector.shape_cast %149 : vector<8xf32> to vector<8x1xf32>
    %cst_71 = arith.constant dense<0.000000e+00> : vector<8x128xf32>
    %151 = tpu.matmul %144, %6, %cst_71 {dimension_numbers = #tpu.dot_dimension_numbers<[1], [0], [0], [1], [0, 0, 1, 1], [], []>} : vector<8x128xf32>, vector<128x128xf32>, vector<8x128xf32> -> vector<8x128xf32>
    %152 = arith.addf %138, %151 : vector<8x128xf32>
    %153 = arith.addf %152, %10 : vector<8x128xf32>
    %154 = vector.broadcast %150 : vector<8x1xf32> to vector<8x128xf32>
    %155 = arith.mulf %154, %11 : vector<8x128xf32>
    %156 = arith.subf %153, %155 : vector<8x128xf32>
    %c8_i32 = arith.constant 8 : i32
    %c0_72 = arith.constant 0 : index
    %c0_73 = arith.constant 0 : index
    %157 = vector.load %arg8[%c0_72, %c0_73] : memref<8x128xf32, #tpu.memory_space<vmem>>, vector<8x128xf32>
    tpu.vector_store %arg8[%c0_72, %c0_73], %156 {strides = array<i32>} : memref<8x128xf32, #tpu.memory_space<vmem>>, vector<8x128xf32>,
    return
  }
  func.func @transform_0(%arg0: i32) -> (i32, i32) {
    %c0_i32 = arith.constant 0 : i32
    %c0_i32_0 = arith.constant 0 : i32
    %c0_i32_1 = arith.constant 0 : i32
    return %c0_i32, %c0_i32_0 : i32, i32
  }
  func.func @transform_1(%arg0: i32) -> (i32, i32, i32) {
    %c0_i32 = arith.constant 0 : i32
    %c0_i32_0 = arith.constant 0 : i32
    %c0_i32_1 = arith.constant 0 : i32
    return %arg0, %c0_i32, %c0_i32_0 : i32, i32, i32
  }
  func.func @transform_2(%arg0: i32) -> (i32, i32, i32, i32) {
    %c0_i32 = arith.constant 0 : i32
    %c0_i32_0 = arith.constant 0 : i32
    %c0_i32_1 = arith.constant 0 : i32
    %c0_i32_2 = arith.constant 0 : i32
    return %arg0, %c0_i32, %c0_i32_0, %c0_i32_1 : i32, i32, i32, i32
  }
  func.func @transform_3(%arg0: i32) -> (i32, i32, i32) {
    %c0_i32 = arith.constant 0 : i32
    %c0_i32_0 = arith.constant 0 : i32
    %c0_i32_1 = arith.constant 0 : i32
    return %arg0, %c0_i32, %c0_i32_0 : i32, i32, i32
  }
  func.func @transform_4(%arg0: i32) -> (i32, i32, i32) {
    %c0_i32 = arith.constant 0 : i32
    %c0_i32_0 = arith.constant 0 : i32
    %c0_i32_1 = arith.constant 0 : i32
    return %arg0, %c0_i32, %c0_i32_0 : i32, i32, i32
  }
  func.func @transform_5(%arg0: i32) -> (i32, i32, i32) {
    %c0_i32 = arith.constant 0 : i32
    %c0_i32_0 = arith.constant 0 : i32
    %c0_i32_1 = arith.constant 0 : i32
    return %arg0, %c0_i32, %c0_i32_0 : i32, i32, i32
  }
  func.func @transform_6(%arg0: i32) -> (i32, i32) {
    %c0_i32 = arith.constant 0 : i32
    %c0_i32_0 = arith.constant 0 : i32
    %c0_i32_1 = arith.constant 0 : i32
    return %c0_i32, %c0_i32_0 : i32, i32
  }
  func.func @transform_7(%arg0: i32) -> (i32, i32) {
    %c0_i32 = arith.constant 0 : i32
    %c0_i32_0 = arith.constant 0 : i32
    %c0_i32_1 = arith.constant 0 : i32
    return %c0_i32, %c0_i32_0 : i32, i32
  }
}

</mosaic_0001>

<llo_original>
// kernel: _cnf_forward.1
$region0: #{_cnf_forward.1}
  #allocation0 [shape = 'u32[]', space=smem, size = 0x4, offset = 0x4, fixed_abs, tag = 'smem constant byte address 0x4 - core index']
  #allocation1 [shape = 'u32[144,128]{1,0:T(1,128)}', space=vmem, size = 0x12000, scoped, tag = 'internal scratch']
  %s0 = inlined_call_operand.vmem [shape: f32[8,128], index: 0, kind: input, shape index: {}]
  %s1 = inlined_call_operand.vmem [shape: f32[2,128,128], index: 1, kind: input, shape index: {}]
  %s2 = inlined_call_operand.vmem [shape: f32[2,8,8,128], index: 2, kind: input, shape index: {}]
  %s3 = inlined_call_operand.vmem [shape: f32[2,128,128], index: 3, kind: input, shape index: {}]
  %s4 = inlined_call_operand.vmem [shape: f32[2,8,128], index: 4, kind: input, shape index: {}]
  %s5 = inlined_call_operand.vmem [shape: f32[2,8,128], index: 5, kind: input, shape index: {}]
  %s6 = inlined_call_operand.vmem [shape: f32[8,128], index: 6, kind: input, shape index: {}]
  %s7 = inlined_call_operand.vmem [shape: f32[8,128], index: 7, kind: output, shape index: {}]
  %s8 = sld [smem:[#allocation0]]
  $region65: #{_cnf_forward.1} parent=0
    _
  %s10 = ssub.s32 1, %s8
  %s11 = scalar_select 0, %s10, %s8
  loop: start=0, step=1, limit=4
  $region2: #{_cnf_forward.1} parent=0 // loop_pre_header
    _
  $region3: #{_cnf_forward.1} parent=0 // loop_header
    %s13 = sphi 0, %s17
    %p14 = scmp.ge.s32.totalorder %s13, 4
    %s21 = sphi 0, %s21
    %s23 = sphi 0, %s21
    %s24 = sphi 0, %s23
    %s38 = sphi 0, %s24
    %s44 = sphi 0, %s46
    %s47 = sphi 0, %s44
    %s48 = sphi 0, %s47
    %s64 = sphi 0, %s48
    %s70 = sphi 0, %s72
    %s73 = sphi 0, %s70
    %s74 = sphi 0, %s73
    %s90 = sphi 0, %s74
    %s96 = sphi 0, %s98
    %s99 = sphi 0, %s96
    %s100 = sphi 0, %s99
    %s116 = sphi 0, %s100
    %s122 = sphi 0, %s124
    %s125 = sphi 0, %s122
    %s126 = sphi 0, %s125
    %s142 = sphi 0, %s126
    %s148 = sphi 0, %s150
    %s151 = sphi 0, %s148
    %s152 = sphi 0, %s151
    %s168 = sphi 0, %s152
    %s172 = sphi 0, %s172
    %s174 = sphi 0, %s172
    %s175 = sphi 0, %s174
    %s189 = sphi 0, %s175
    %s193 = sphi 0, %s193
    %s195 = sphi 0, %s193
    %s196 = sphi 0, %s195
    %s210 = sphi 0, %s196
  $region4: #{_cnf_forward.1} parent=0 // loop_header_branch
    %16 = sbr.rel (%p14) target = $region8
  $region5: #{_cnf_forward.1} parent=0 // loop_body
    %s18 = ssub.s32 %s13, 1
    %s19 = ssub.s32 %s13, 2
    %s20 = sadd.s32 %s13, 1
    %s22 = sadd.s32 %s21, 1
    %p25 = scmp.eq.s32.totalorder %s13, 1
    %p26 = scmp.ne.s32.totalorder %s21, %s23
    %p27 = scmp.eq.s32.totalorder %s13, 0
    %p28 = por %p26, %p27
    %p29 = scmp.ne.s32.totalorder %s21, %s23
    %p30 = scmp.eq.s32.totalorder %s18, 1
    %p31 = por %p29, %p30
    %p32 = scmp.ne.s32.totalorder %s23, %s24
    %p33 = scmp.eq.s32.totalorder %s18, 0
    %p34 = por %p32, %p33
    %p35 = scmp.ne.s32.totalorder %s23, %s24
    %p36 = scmp.eq.s32.totalorder %s19, 1
    %p37 = por %p35, %p36
    %p39 = scmp.ne.s32.totalorder %s24, %s38
    %p40 = scmp.eq.s32.totalorder %s19, 0
    %p41 = por %p39, %p40
    %s42 = ssub.s32 %s13, %s20
    %p43 = scmp.eq.s32.totalorder %s42, 0
    %s45 = sadd.s32 %s44, 1
    %s46 = scalar_select %p43, %s44, %s45
    %p49 = pneg %p43
    %p50 = scmp.eq.s32.totalorder %s13, 1
    %p51 = por %p49, %p50
    %p52 = scmp.ne.s32.totalorder %s44, %s47
    %p53 = scmp.eq.s32.totalorder %s13, 0
    %p54 = por %p52, %p53
    %p55 = scmp.ne.s32.totalorder %s44, %s47
    %p56 = scmp.eq.s32.totalorder %s18, 1
    %p57 = por %p55, %p56
    %p58 = scmp.ne.s32.totalorder %s47, %s48
    %p59 = scmp.eq.s32.totalorder %s18, 0
    %p60 = por %p58, %p59
    %p61 = scmp.ne.s32.totalorder %s47, %s48
    %p62 = scmp.eq.s32.totalorder %s19, 1
    %p63 = por %p61, %p62
    %p65 = scmp.ne.s32.totalorder %s48, %s64
    %p66 = scmp.eq.s32.totalorder %s19, 0
    %p67 = por %p65, %p66
    %s68 = ssub.s32 %s13, %s20
    %p69 = scmp.eq.s32.totalorder %s68, 0
    %s71 = sadd.s32 %s70, 1
    %s72 = scalar_select %p69, %s70, %s71
    %p75 = pneg %p69
    %p76 = scmp.eq.s32.totalorder %s13, 1
    %p77 = por %p75, %p76
    %p78 = scmp.ne.s32.totalorder %s70, %s73
    %p79 = scmp.eq.s32.totalorder %s13, 0
    %p80 = por %p78, %p79
    %p81 = scmp.ne.s32.totalorder %s70, %s73
    %p82 = scmp.eq.s32.totalorder %s18, 1
    %p83 = por %p81, %p82
    %p84 = scmp.ne.s32.totalorder %s73, %s74
    %p85 = scmp.eq.s32.totalorder %s18, 0
    %p86 = por %p84, %p85
    %p87 = scmp.ne.s32.totalorder %s73, %s74
    %p88 = scmp.eq.s32.totalorder %s19, 1
    %p89 = por %p87, %p88
    %p91 = scmp.ne.s32.totalorder %s74, %s90
    %p92 = scmp.eq.s32.totalorder %s19, 0
    %p93 = por %p91, %p92
    %s94 = ssub.s32 %s13, %s20
    %p95 = scmp.eq.s32.totalorder %s94, 0
    %s97 = sadd.s32 %s96, 1
    %s98 = scalar_select %p95, %s96, %s97
    %p101 = pneg %p95
    %p102 = scmp.eq.s32.totalorder %s13, 1
    %p103 = por %p101, %p102
    %p104 = scmp.ne.s32.totalorder %s96, %s99
    %p105 = scmp.eq.s32.totalorder %s13, 0
    %p106 = por %p104, %p105
    %p107 = scmp.ne.s32.totalorder %s96, %s99
    %p108 = scmp.eq.s32.totalorder %s18, 1
    %p109 = por %p107, %p108
    %p110 = scmp.ne.s32.totalorder %s99, %s100
    %p111 = scmp.eq.s32.totalorder %s18, 0
    %p112 = por %p110, %p111
    %p113 = scmp.ne.s32.totalorder %s99, %s100
    %p114 = scmp.eq.s32.totalorder %s19, 1
    %p115 = por %p113, %p114
    %p117 = scmp.ne.s32.totalorder %s100, %s116
    %p118 = scmp.eq.s32.totalorder %s19, 0
    %p119 = por %p117, %p118
    %s120 = ssub.s32 %s13, %s20
    %p121 = scmp.eq.s32.totalorder %s120, 0
    %s123 = sadd.s32 %s122, 1
    %s124 = scalar_select %p121, %s122, %s123
    %p127 = pneg %p121
    %p128 = scmp.eq.s32.totalorder %s13, 1
    %p129 = por %p127, %p128
    %p130 = scmp.ne.s32.totalorder %s122, %s125
    %p131 = scmp.eq.s32.totalorder %s13, 0
    %p132 = por %p130, %p131
    %p133 = scmp.ne.s32.totalorder %s122, %s125
    %p134 = scmp.eq.s32.totalorder %s18, 1
    %p135 = por %p133, %p134
    %p136 = scmp.ne.s32.totalorder %s125, %s126
    %p137 = scmp.eq.s32.totalorder %s18, 0
    %p138 = por %p136, %p137
    %p139 = scmp.ne.s32.totalorder %s125, %s126
    %p140 = scmp.eq.s32.totalorder %s19, 1
    %p141 = por %p139, %p140
    %p143 = scmp.ne.s32.totalorder %s126, %s142
    %p144 = scmp.eq.s32.totalorder %s19, 0
    %p145 = por %p143, %p144
    %s146 = ssub.s32 %s13, %s20
    %p147 = scmp.eq.s32.totalorder %s146, 0
    %s149 = sadd.s32 %s148, 1
    %s150 = scalar_select %p147, %s148, %s149
    %p153 = pneg %p147
    %p154 = scmp.eq.s32.totalorder %s13, 1
    %p155 = por %p153, %p154
    %p156 = scmp.ne.s32.totalorder %s148, %s151
    %p157 = scmp.eq.s32.totalorder %s13, 0
    %p158 = por %p156, %p157
    %p159 = scmp.ne.s32.totalorder %s148, %s151
    %p160 = scmp.eq.s32.totalorder %s18, 1
    %p161 = por %p159, %p160
    %p162 = scmp.ne.s32.totalorder %s151, %s152
    %p163 = scmp.eq.s32.totalorder %s18, 0
    %p164 = por %p162, %p163
    %p165 = scmp.ne.s32.totalorder %s151, %s152
    %p166 = scmp.eq.s32.totalorder %s19, 1
    %p167 = por %p165, %p166
    %p169 = scmp.ne.s32.totalorder %s152, %s168
    %p170 = scmp.eq.s32.totalorder %s19, 0
    %p171 = por %p169, %p170
    %s173 = sadd.s32 %s172, 1
    %p176 = scmp.eq.s32.totalorder %s13, 1
    %p177 = scmp.ne.s32.totalorder %s172, %s174
    %p178 = scmp.eq.s32.totalorder %s13, 0
    %p179 = por %p177, %p178
    %p180 = scmp.ne.s32.totalorder %s172, %s174
    %p181 = scmp.eq.s32.totalorder %s18, 1
    %p182 = por %p180, %p181
    %p183 = scmp.ne.s32.totalorder %s174, %s175
    %p184 = scmp.eq.s32.totalorder %s18, 0
    %p185 = por %p183, %p184
    %p186 = scmp.ne.s32.totalorder %s174, %s175
    %p187 = scmp.eq.s32.totalorder %s19, 1
    %p188 = por %p186, %p187
    %p190 = scmp.ne.s32.totalorder %s175, %s189
    %p191 = scmp.eq.s32.totalorder %s19, 0
    %p192 = por %p190, %p191
    %s194 = sadd.s32 %s193, 1
    %p197 = scmp.eq.s32.totalorder %s13, 1
    %p198 = scmp.ne.s32.totalorder %s193, %s195
    %p199 = scmp.eq.s32.totalorder %s13, 0
    %p200 = por %p198, %p199
    %p201 = scmp.ne.s32.totalorder %s193, %s195
    %p202 = scmp.eq.s32.totalorder %s18, 1
    %p203 = por %p201, %p202
    %p204 = scmp.ne.s32.totalorder %s195, %s196
    %p205 = scmp.eq.s32.totalorder %s18, 0
    %p206 = por %p204, %p205
    %p207 = scmp.ne.s32.totalorder %s195, %s196
    %p208 = scmp.eq.s32.totalorder %s19, 1
    %p209 = por %p207, %p208
    %p211 = scmp.ne.s32.totalorder %s196, %s210
    %p212 = scmp.eq.s32.totalorder %s19, 0
    %p213 = por %p211, %p212
    %p214 = scmp.le.s32.totalorder 1, %s13
    %p215 = scmp.lt.s32.totalorder %s13, 3
    %p216 = pnand %p214, %p215
    %p217 = pneg %p216
    // Predicated region
    $region9: #{_cnf_forward.1} parent=5 // pred_check
      _
    $region10: #{_cnf_forward.1} parent=5 // pred_check_branch
      %219 = sbr.rel (%p216) target = $region12
    $region11: #{_cnf_forward.1} parent=5 // pred_region
      %s220 = ssub.s32 %s13, 1
      // Predicated region
      $region13: #{_cnf_forward.1} parent=11 // pred_check
        %p221 = pneg %p34
      $region14: #{_cnf_forward.1} parent=11 // pred_check_branch
        %223 = sbr.rel (%p221) target = $region16
      $region15: #{_cnf_forward.1} parent=11 // pred_region
        _
      $region16: #{_cnf_forward.1} parent=11 // pred_fallthru
        _
      // Predicated region
      $region17: #{_cnf_forward.1} parent=11 // pred_check
        %p224 = pneg %p185
      $region18: #{_cnf_forward.1} parent=11 // pred_check_branch
        %226 = sbr.rel (%p224) target = $region20
      $region19: #{_cnf_forward.1} parent=11 // pred_region
        _
      $region20: #{_cnf_forward.1} parent=11 // pred_fallthru
        _
    $region12: #{_cnf_forward.1} parent=5 // pred_fallthru
      _
    %p227 = scmp.lt.s32.totalorder %s13, 2
    // Predicated region
    $region21: #{_cnf_forward.1} parent=5 // pred_check
      %p228 = pneg %p227
    $region22: #{_cnf_forward.1} parent=5 // pred_check_branch
      %230 = sbr.rel (%p228) target = $region24
    $region23: #{_cnf_forward.1} parent=5 // pred_region
      // Predicated region
      $region25: #{_cnf_forward.1} parent=23 // pred_check
        %p231 = pneg %p54
      $region26: #{_cnf_forward.1} parent=23 // pred_check_branch
        %233 = sbr.rel (%p231) target = $region28
      $region27: #{_cnf_forward.1} parent=23 // pred_region
        %p234 = scmp.lt.s32.totalorder %s13, 1
        %s235 = scalar_select %p234, %s13, 1
        %s236 = smul.addr %s235, 16
        %s237 = smul.addr %s236, 8
        %s238 = scalar_lea.vmem %s1, %s237
      $region28: #{_cnf_forward.1} parent=23 // pred_fallthru
        _
      // Predicated region
      $region29: #{_cnf_forward.1} parent=23 // pred_check
        %p239 = pneg %p80
      $region30: #{_cnf_forward.1} parent=23 // pred_check_branch
        %241 = sbr.rel (%p239) target = $region32
      $region31: #{_cnf_forward.1} parent=23 // pred_region
        %p242 = scmp.lt.s32.totalorder %s13, 1
        %s243 = scalar_select %p242, %s13, 1
        %s244 = smul.addr %s243, 8
        %s245 = smul.addr %s244, 8
        %s246 = scalar_lea.vmem %s2, %s245
      $region32: #{_cnf_forward.1} parent=23 // pred_fallthru
        _
      // Predicated region
      $region33: #{_cnf_forward.1} parent=23 // pred_check
        %p247 = pneg %p106
      $region34: #{_cnf_forward.1} parent=23 // pred_check_branch
        %249 = sbr.rel (%p247) target = $region36
      $region35: #{_cnf_forward.1} parent=23 // pred_region
        %p250 = scmp.lt.s32.totalorder %s13, 1
        %s251 = scalar_select %p250, %s13, 1
        %s252 = smul.addr %s251, 16
        %s253 = smul.addr %s252, 8
        %s254 = scalar_lea.vmem %s3, %s253
      $region36: #{_cnf_forward.1} parent=23 // pred_fallthru
        _
      // Predicated region
      $region37: #{_cnf_forward.1} parent=23 // pred_check
        %p255 = pneg %p132
      $region38: #{_cnf_forward.1} parent=23 // pred_check_branch
        %257 = sbr.rel (%p255) target = $region40
      $region39: #{_cnf_forward.1} parent=23 // pred_region
        %p258 = scmp.lt.s32.totalorder %s13, 1
        %s259 = scalar_select %p258, %s13, 1
        %s260 = smul.addr %s259, 8
        %s261 = scalar_lea.vmem %s4, %s260
      $region40: #{_cnf_forward.1} parent=23 // pred_fallthru
        _
      // Predicated region
      $region41: #{_cnf_forward.1} parent=23 // pred_check
        %p262 = pneg %p158
      $region42: #{_cnf_forward.1} parent=23 // pred_check_branch
        %264 = sbr.rel (%p262) target = $region44
      $region43: #{_cnf_forward.1} parent=23 // pred_region
        %p265 = scmp.lt.s32.totalorder %s13, 1
        %s266 = scalar_select %p265, %s13, 1
        %s267 = smul.addr %s266, 8
        %s268 = scalar_lea.vmem %s5, %s267
      $region44: #{_cnf_forward.1} parent=23 // pred_fallthru
        _
    $region24: #{_cnf_forward.1} parent=5 // pred_fallthru
      _
    %p269 = scmp.le.s32.totalorder 1, %s13
    %p270 = scmp.lt.s32.totalorder %s13, 3
    %p271 = pnand %p269, %p270
    %p272 = pneg %p271
    // Predicated region
    $region45: #{_cnf_forward.1} parent=5 // pred_check
      _
    $region46: #{_cnf_forward.1} parent=5 // pred_check_branch
      %274 = sbr.rel (%p271) target = $region48
    $region47: #{_cnf_forward.1} parent=5 // pred_region
      %s275 = ssub.s32 %s13, 1
      %p276 = pneg %p34
      %p277 = pneg %p31
      %p278 = scmp.lt.s32.totalorder %s18, 1
      %s279 = scalar_select %p278, %s18, 1
      %s280 = smul.addr %s279, 16
      %s281 = smul.addr %s280, 8
      %s282 = scalar_lea.vmem %s1, %s281
      %p283 = pneg %p60
      %p284 = pneg %p57
      %p285 = scmp.lt.s32.totalorder %s18, 1
      %s286 = scalar_select %p285, %s18, 1
      %s287 = smul.addr %s286, 8
      %s288 = smul.addr %s287, 8
      %s289 = scalar_lea.vmem %s2, %s288
      %p290 = pneg %p86
      %p291 = pneg %p83
      %p292 = scmp.lt.s32.totalorder %s18, 1
      %s293 = scalar_select %p292, %s18, 1
      %s294 = smul.addr %s293, 16
      %s295 = smul.addr %s294, 8
      %s296 = scalar_lea.vmem %s3, %s295
      %p297 = pneg %p112
      %p298 = pneg %p109
      %p299 = scmp.lt.s32.totalorder %s18, 1
      %s300 = scalar_select %p299, %s18, 1
      %s301 = smul.addr %s300, 8
      %s302 = scalar_lea.vmem %s4, %s301
      %p303 = pneg %p138
      %p304 = pneg %p135
      %p305 = scmp.lt.s32.totalorder %s18, 1
      %s306 = scalar_select %p305, %s18, 1
      %s307 = smul.addr %s306, 8
      %s308 = scalar_lea.vmem %s5, %s307
      %p309 = pneg %p164
      %p310 = pneg %p161
      %p311 = pneg %p185
      %p312 = pneg %p182
      %p313 = pneg %p206
      %p314 = pneg %p203
      %p315 = scmp.lt.s32.totalorder %s18, 1
      %s316 = scalar_select %p315, %s18, 1
      %s317 = smul.addr %s316, 16
      %s318 = smul.addr %s317, 8
      %s319 = scalar_lea.vmem %s1, %s318
      %p320 = scmp.lt.s32.totalorder %s18, 1
      %s321 = scalar_select %p320, %s18, 1
      %s322 = smul.addr %s321, 8
      %s323 = smul.addr %s322, 8
      %s324 = scalar_lea.vmem %s2, %s323
      %p325 = scmp.lt.s32.totalorder %s18, 1
      %s326 = scalar_select %p325, %s18, 1
      %s327 = smul.addr %s326, 16
      %s328 = smul.addr %s327, 8
      %s329 = scalar_lea.vmem %s3, %s328
      %p330 = scmp.lt.s32.totalorder %s18, 1
      %s331 = scalar_select %p330, %s18, 1
      %s332 = smul.addr %s331, 8
      %s333 = scalar_lea.vmem %s4, %s332
      %p334 = scmp.lt.s32.totalorder %s18, 1
      %s335 = scalar_select %p334, %s18, 1
      %s336 = smul.addr %s335, 8
      %s337 = scalar_lea.vmem %s5, %s336
      %p338 = scmp.eq.s32.totalorder %s18, 0
      // Predicated region
      $region49: #{_cnf_forward.1} parent=47 // pred_check
        %p339 = pneg %p338
      $region50: #{_cnf_forward.1} parent=47 // pred_check_branch
        %341 = sbr.rel (%p339) target = $region52
      $region51: #{_cnf_forward.1} parent=47 // pred_region
        %v342 = vld [vmem:[%s0] sm:$0xff]
        %343 = vst [vmem:[%s7] sm:$0xff] %v342
      $region52: #{_cnf_forward.1} parent=47 // pred_fallthru
        _
      %v344 = vld [vmem:[%s319] sm:$0xff]
      %v345 = vld [vmem:[%s319 + $0x8] sm:$0xff]
      %v346 = vld [vmem:[%s319 + $0x10] sm:$0xff]
      %v347 = vld [vmem:[%s319 + $0x18] sm:$0xff]
      %v348 = vld [vmem:[%s319 + $0x20] sm:$0xff]
      %v349 = vld [vmem:[%s319 + $0x28] sm:$0xff]
      %v350 = vld [vmem:[%s319 + $0x30] sm:$0xff]
      %v351 = vld [vmem:[%s319 + $0x38] sm:$0xff]
      %v352 = vld [vmem:[%s319 + $0x40] sm:$0xff]
      %v353 = vld [vmem:[%s319 + $0x48] sm:$0xff]
      %v354 = vld [vmem:[%s319 + $0x50] sm:$0xff]
      %v355 = vld [vmem:[%s319 + $0x58] sm:$0xff]
      %v356 = vld [vmem:[%s319 + $0x60] sm:$0xff]
      %v357 = vld [vmem:[%s319 + $0x68] sm:$0xff]
      %v358 = vld [vmem:[%s319 + $0x70] sm:$0xff]
      %v359 = vld [vmem:[%s319 + $0x78] sm:$0xff]
      %v360 = vld [vmem:[%s329] sm:$0xff]
      %v361 = vld [vmem:[%s329 + $0x8] sm:$0xff]
      %v362 = vld [vmem:[%s329 + $0x10] sm:$0xff]
      %v363 = vld [vmem:[%s329 + $0x18] sm:$0xff]
      %v364 = vld [vmem:[%s329 + $0x20] sm:$0xff]
      %v365 = vld [vmem:[%s329 + $0x28] sm:$0xff]
      %v366 = vld [vmem:[%s329 + $0x30] sm:$0xff]
      %v367 = vld [vmem:[%s329 + $0x38] sm:$0xff]
      %v368 = vld [vmem:[%s329 + $0x40] sm:$0xff]
      %v369 = vld [vmem:[%s329 + $0x48] sm:$0xff]
      %v370 = vld [vmem:[%s329 + $0x50] sm:$0xff]
      %v371 = vld [vmem:[%s329 + $0x58] sm:$0xff]
      %v372 = vld [vmem:[%s329 + $0x60] sm:$0xff]
      %v373 = vld [vmem:[%s329 + $0x68] sm:$0xff]
      %v374 = vld [vmem:[%s329 + $0x70] sm:$0xff]
      %v375 = vld [vmem:[%s329 + $0x78] sm:$0xff]
      %v376 = vld [vmem:[%s333] sm:$0xff]
      %v377 = vld [vmem:[%s337] sm:$0xff]
      %v378 = vld [vmem:[%s6] sm:$0xff]
      %v379 = vld [vmem:[%s7] sm:$0xff]
      %v380 = vld [vmem:[%s324] sm:$0xff]
      %381 = vmatprep.subr.mxu0 0.0
      %382 = vmatpush1.msra.mxu0 %v344
      %383 = vmatprep.subr.mxu0 0.0
      %384 = vmatpush1.msra.mxu0 %v345
      %385 = vmatprep.subr.mxu0 0.0
      %386 = vmatpush1.msra.mxu0 %v346
      %387 = vmatprep.subr.mxu0 0.0
      %388 = vmatpush1.msra.mxu0 %v347
      %389 = vmatprep.subr.mxu0 0.0
      %390 = vmatpush1.msra.mxu0 %v348
      %391 = vmatprep.subr.mxu0 0.0
      %392 = vmatpush1.msra.mxu0 %v349
      %393 = vmatprep.subr.mxu0 0.0
      %394 = vmatpush1.msra.mxu0 %v350
      %395 = vmatprep.subr.mxu0 0.0
      %396 = vmatpush1.msra.mxu0 %v351
      %397 = vmatprep.subr.mxu0 0.0
      %398 = vmatpush1.msra.mxu0 %v352
      %399 = vmatprep.subr.mxu0 0.0
      %400 = vmatpush1.msra.mxu0 %v353
      %401 = vmatprep.subr.mxu0 0.0
      %402 = vmatpush1.msra.mxu0 %v354
      %403 = vmatprep.subr.mxu0 0.0
      %404 = vmatpush1.msra.mxu0 %v355
      %405 = vmatprep.subr.mxu0 0.0
      %406 = vmatpush1.msra.mxu0 %v356
      %407 = vmatprep.subr.mxu0 0.0
      %408 = vmatpush1.msra.mxu0 %v357
      %409 = vmatprep.subr.mxu0 0.0
      %410 = vmatpush1.msra.mxu0 %v358
      %411 = vmatprep.subr.mxu0 0.0
      %412 = vmatpush1.msra.mxu0 %v359
      %413 = vmatprep.subr.mxu0 0.0
      %414 = vmatpush1.msra.mxu0 0.0
      %415 = vmatprep.subr.mxu0 0.0
      %416 = vmatpush1.msra.mxu0 0.0
      %417 = vmatprep.subr.mxu0 0.0
      %418 = vmatpush1.msra.mxu0 0.0
      %419 = vmatprep.subr.mxu0 0.0
      %420 = vmatpush1.msra.mxu0 0.0
      %421 = vmatprep.subr.mxu0 0.0
      %422 = vmatpush1.msra.mxu0 0.0
      %423 = vmatprep.subr.mxu0 0.0
      %424 = vmatpush1.msra.mxu0 0.0
      %425 = vmatprep.subr.mxu0 0.0
      %426 = vmatpush1.msra.mxu0 0.0
      %427 = vmatprep.subr.mxu0 0.0
      %428 = vmatpush1.msra.mxu0 0.0
      %429 = vmatprep.subr.mxu0 0.0
      %430 = vmatpush1.msra.mxu0 0.0
      %431 = vmatprep.subr.mxu0 0.0
      %432 = vmatpush1.msra.mxu0 0.0
      %433 = vmatprep.subr.mxu0 0.0
      %434 = vmatpush1.msra.mxu0 0.0
      %435 = vmatprep.subr.mxu0 0.0
      %436 = vmatpush1.msra.mxu0 0.0
      %437 = vmatprep.subr.mxu0 0.0
      %438 = vmatpush1.msra.mxu0 0.0
      %439 = vmatprep.subr.mxu0 0.0
      %440 = vmatpush1.msra.mxu0 0.0
      %441 = vmatprep.subr.mxu0 0.0
      %442 = vmatpush1.msra.mxu0 0.0
      %443 = vmatprep.subr.mxu0 0.0
      %444 = vmatpush1.msra.mxu0 0.0
      %445 = vmatprep.mubr.f32.mxu0 0.0
      %446 = vmatmul.mubr.f32.gmra.mrb[0].mxu0 %v379
      %v447 = vpop.f32.mrb[0].mxu0
      %v448 = vadd.f32 %v380, %v447
      %v449 = vpop.f32.mrb[0].mxu0
      %450 = vdwg.mxu0
      %v451 = vtanh.pop %v448
      %v452 = vmul.f32 %v451, %v451
      %v453 = vsub.f32 1.0, %v452
      %v454 = vmul.f32 %v453, %v376
      %455 = vadd.xlane.f32.xlu0 %v454
      %v456 = vpop.xlane.xlu0 %455
      %457 = vmatprep.subr.mxu0 0.0
      %458 = vmatpush1.msra.mxu0 %v360
      %459 = vmatprep.subr.mxu0 0.0
      %460 = vmatpush1.msra.mxu0 %v361
      %461 = vmatprep.subr.mxu0 0.0
      %462 = vmatpush1.msra.mxu0 %v362
      %463 = vmatprep.subr.mxu0 0.0
      %464 = vmatpush1.msra.mxu0 %v363
      %465 = vmatprep.subr.mxu0 0.0
      %466 = vmatpush1.msra.mxu0 %v364
      %467 = vmatprep.subr.mxu0 0.0
      %468 = vmatpush1.msra.mxu0 %v365
      %469 = vmatprep.subr.mxu0 0.0
      %470 = vmatpush1.msra.mxu0 %v366
      %471 = vmatprep.subr.mxu0 0.0
      %472 = vmatpush1.msra.mxu0 %v367
      %473 = vmatprep.subr.mxu0 0.0
      %474 = vmatpush1.msra.mxu0 %v368
      %475 = vmatprep.subr.mxu0 0.0
      %476 = vmatpush1.msra.mxu0 %v369
      %477 = vmatprep.subr.mxu0 0.0
      %478 = vmatpush1.msra.mxu0 %v370
      %479 = vmatprep.subr.mxu0 0.0
      %480 = vmatpush1.msra.mxu0 %v371
      %481 = vmatprep.subr.mxu0 0.0
      %482 = vmatpush1.msra.mxu0 %v372
      %483 = vmatprep.subr.mxu0 0.0
      %484 = vmatpush1.msra.mxu0 %v373
      %485 = vmatprep.subr.mxu0 0.0
      %486 = vmatpush1.msra.mxu0 %v374
      %487 = vmatprep.subr.mxu0 0.0
      %488 = vmatpush1.msra.mxu0 %v375
      %489 = vmatprep.subr.mxu0 0.0
      %490 = vmatpush1.msra.mxu0 0.0
      %491 = vmatprep.subr.mxu0 0.0
      %492 = vmatpush1.msra.mxu0 0.0
      %493 = vmatprep.subr.mxu0 0.0
      %494 = vmatpush1.msra.mxu0 0.0
      %495 = vmatprep.subr.mxu0 0.0
      %496 = vmatpush1.msra.mxu0 0.0
      %497 = vmatprep.subr.mxu0 0.0
      %498 = vmatpush1.msra.mxu0 0.0
      %499 = vmatprep.subr.mxu0 0.0
      %500 = vmatpush1.msra.mxu0 0.0
      %501 = vmatprep.subr.mxu0 0.0
      %502 = vmatpush1.msra.mxu0 0.0
      %503 = vmatprep.subr.mxu0 0.0
      %504 = vmatpush1.msra.mxu0 0.0
      %505 = vmatprep.subr.mxu0 0.0
      %506 = vmatpush1.msra.mxu0 0.0
      %507 = vmatprep.subr.mxu0 0.0
      %508 = vmatpush1.msra.mxu0 0.0
      %509 = vmatprep.subr.mxu0 0.0
      %510 = vmatpush1.msra.mxu0 0.0
      %511 = vmatprep.subr.mxu0 0.0
      %512 = vmatpush1.msra.mxu0 0.0
      %513 = vmatprep.subr.mxu0 0.0
      %514 = vmatpush1.msra.mxu0 0.0
      %515 = vmatprep.subr.mxu0 0.0
      %516 = vmatpush1.msra.mxu0 0.0
      %517 = vmatprep.subr.mxu0 0.0
      %518 = vmatpush1.msra.mxu0 0.0
      %519 = vmatprep.subr.mxu0 0.0
      %520 = vmatpush1.msra.mxu0 0.0
      %521 = vmatprep.mubr.f32.mxu0 0.0
      %522 = vmatmul.mubr.f32.gmra.mrb[0].mxu0 %v451
      %v523 = vpop.f32.mrb[0].mxu0
      %v524 = vadd.f32 0.0, %v523
      %v525 = vpop.f32.mrb[0].mxu0
      %526 = vdwg.mxu0
      %v527 = vadd.f32 %v379, %v524
      %v528 = vadd.f32 %v527, %v377
      %v529 = vmul.f32 %v456, %v378
      %v530 = vsub.f32 %v528, %v529
      %s531 = scalar_lea.vmem %s324, 8
      %v532 = vld [vmem:[%s531] sm:$0xff]
      %533 = vmatprep.subr.mxu0 0.0
      %534 = vmatpush1.msra.mxu0 %v344
      %535 = vmatprep.subr.mxu0 0.0
      %536 = vmatpush1.msra.mxu0 %v345
      %537 = vmatprep.subr.mxu0 0.0
      %538 = vmatpush1.msra.mxu0 %v346
      %539 = vmatprep.subr.mxu0 0.0
      %540 = vmatpush1.msra.mxu0 %v347
      %541 = vmatprep.subr.mxu0 0.0
      %542 = vmatpush1.msra.mxu0 %v348
      %543 = vmatprep.subr.mxu0 0.0
      %544 = vmatpush1.msra.mxu0 %v349
      %545 = vmatprep.subr.mxu0 0.0
      %546 = vmatpush1.msra.mxu0 %v350
      %547 = vmatprep.subr.mxu0 0.0
      %548 = vmatpush1.msra.mxu0 %v351
      %549 = vmatprep.subr.mxu0 0.0
      %550 = vmatpush1.msra.mxu0 %v352
      %551 = vmatprep.subr.mxu0 0.0
      %552 = vmatpush1.msra.mxu0 %v353
      %553 = vmatprep.subr.mxu0 0.0
      %554 = vmatpush1.msra.mxu0 %v354
      %555 = vmatprep.subr.mxu0 0.0
      %556 = vmatpush1.msra.mxu0 %v355
      %557 = vmatprep.subr.mxu0 0.0
      %558 = vmatpush1.msra.mxu0 %v356
      %559 = vmatprep.subr.mxu0 0.0
      %560 = vmatpush1.msra.mxu0 %v357
      %561 = vmatprep.subr.mxu0 0.0
      %562 = vmatpush1.msra.mxu0 %v358
      %563 = vmatprep.subr.mxu0 0.0
      %564 = vmatpush1.msra.mxu0 %v359
      %565 = vmatprep.subr.mxu0 0.0
      %566 = vmatpush1.msra.mxu0 0.0
      %567 = vmatprep.subr.mxu0 0.0
      %568 = vmatpush1.msra.mxu0 0.0
      %569 = vmatprep.subr.mxu0 0.0
      %570 = vmatpush1.msra.mxu0 0.0
      %571 = vmatprep.subr.mxu0 0.0
      %572 = vmatpush1.msra.mxu0 0.0
      %573 = vmatprep.subr.mxu0 0.0
      %574 = vmatpush1.msra.mxu0 0.0
      %575 = vmatprep.subr.mxu0 0.0
      %576 = vmatpush1.msra.mxu0 0.0
      %577 = vmatprep.subr.mxu0 0.0
      %578 = vmatpush1.msra.mxu0 0.0
      %579 = vmatprep.subr.mxu0 0.0
      %580 = vmatpush1.msra.mxu0 0.0
      %581 = vmatprep.subr.mxu0 0.0
      %582 = vmatpush1.msra.mxu0 0.0
      %583 = vmatprep.subr.mxu0 0.0
      %584 = vmatpush1.msra.mxu0 0.0
      %585 = vmatprep.subr.mxu0 0.0
      %586 = vmatpush1.msra.mxu0 0.0
      %587 = vmatprep.subr.mxu0 0.0
      %588 = vmatpush1.msra.mxu0 0.0
      %589 = vmatprep.subr.mxu0 0.0
      %590 = vmatpush1.msra.mxu0 0.0
      %591 = vmatprep.subr.mxu0 0.0
      %592 = vmatpush1.msra.mxu0 0.0
      %593 = vmatprep.subr.mxu0 0.0
      %594 = vmatpush1.msra.mxu0 0.0
      %595 = vmatprep.subr.mxu0 0.0
      %596 = vmatpush1.msra.mxu0 0.0
      %597 = vmatprep.mubr.f32.mxu0 0.0
      %598 = vmatmul.mubr.f32.gmra.mrb[0].mxu0 %v530
      %v599 = vpop.f32.mrb[0].mxu0
      %v600 = vadd.f32 %v532, %v599
      %v601 = vpop.f32.mrb[0].mxu0
      %602 = vdwg.mxu0
      %v603 = vtanh.pop %v600
      %v604 = vmul.f32 %v603, %v603
      %v605 = vsub.f32 1.0, %v604
      %v606 = vmul.f32 %v605, %v376
      %607 = vadd.xlane.f32.xlu0 %v606
      %v608 = vpop.xlane.xlu0 %607
      %609 = vmatprep.subr.mxu0 0.0
      %610 = vmatpush1.msra.mxu0 %v360
      %611 = vmatprep.subr.mxu0 0.0
      %612 = vmatpush1.msra.mxu0 %v361
      %613 = vmatprep.subr.mxu0 0.0
      %614 = vmatpush1.msra.mxu0 %v362
      %615 = vmatprep.subr.mxu0 0.0
      %616 = vmatpush1.msra.mxu0 %v363
      %617 = vmatprep.subr.mxu0 0.0
      %618 = vmatpush1.msra.mxu0 %v364
      %619 = vmatprep.subr.mxu0 0.0
      %620 = vmatpush1.msra.mxu0 %v365
      %621 = vmatprep.subr.mxu0 0.0
      %622 = vmatpush1.msra.mxu0 %v366
      %623 = vmatprep.subr.mxu0 0.0
      %624 = vmatpush1.msra.mxu0 %v367
      %625 = vmatprep.subr.mxu0 0.0
      %626 = vmatpush1.msra.mxu0 %v368
      %627 = vmatprep.subr.mxu0 0.0
      %628 = vmatpush1.msra.mxu0 %v369
      %629 = vmatprep.subr.mxu0 0.0
      %630 = vmatpush1.msra.mxu0 %v370
      %631 = vmatprep.subr.mxu0 0.0
      %632 = vmatpush1.msra.mxu0 %v371
      %633 = vmatprep.subr.mxu0 0.0
      %634 = vmatpush1.msra.mxu0 %v372
      %635 = vmatprep.subr.mxu0 0.0
      %636 = vmatpush1.msra.mxu0 %v373
      %637 = vmatprep.subr.mxu0 0.0
      %638 = vmatpush1.msra.mxu0 %v374
      %639 = vmatprep.subr.mxu0 0.0
      %640 = vmatpush1.msra.mxu0 %v375
      %641 = vmatprep.subr.mxu0 0.0
      %642 = vmatpush1.msra.mxu0 0.0
      %643 = vmatprep.subr.mxu0 0.0
      %644 = vmatpush1.msra.mxu0 0.0
      %645 = vmatprep.subr.mxu0 0.0
      %646 = vmatpush1.msra.mxu0 0.0
      %647 = vmatprep.subr.mxu0 0.0
      %648 = vmatpush1.msra.mxu0 0.0
      %649 = vmatprep.subr.mxu0 0.0
      %650 = vmatpush1.msra.mxu0 0.0
      %651 = vmatprep.subr.mxu0 0.0
      %652 = vmatpush1.msra.mxu0 0.0
      %653 = vmatprep.subr.mxu0 0.0
      %654 = vmatpush1.msra.mxu0 0.0
      %655 = vmatprep.subr.mxu0 0.0
      %656 = vmatpush1.msra.mxu0 0.0
      %657 = vmatprep.subr.mxu0 0.0
      %658 = vmatpush1.msra.mxu0 0.0
      %659 = vmatprep.subr.mxu0 0.0
      %660 = vmatpush1.msra.mxu0 0.0
      %661 = vmatprep.subr.mxu0 0.0
      %662 = vmatpush1.msra.mxu0 0.0
      %663 = vmatprep.subr.mxu0 0.0
      %664 = vmatpush1.msra.mxu0 0.0
      %665 = vmatprep.subr.mxu0 0.0
      %666 = vmatpush1.msra.mxu0 0.0
      %667 = vmatprep.subr.mxu0 0.0
      %668 = vmatpush1.msra.mxu0 0.0
      %669 = vmatprep.subr.mxu0 0.0
      %670 = vmatpush1.msra.mxu0 0.0
      %671 = vmatprep.subr.mxu0 0.0
      %672 = vmatpush1.msra.mxu0 0.0
      %673 = vmatprep.mubr.f32.mxu0 0.0
      %674 = vmatmul.mubr.f32.gmra.mrb[0].mxu0 %v603
      %v675 = vpop.f32.mrb[0].mxu0
      %v676 = vadd.f32 0.0, %v675
      %v677 = vpop.f32.mrb[0].mxu0
      %678 = vdwg.mxu0
      %v679 = vadd.f32 %v530, %v676
      %v680 = vadd.f32 %v679, %v377
      %v681 = vmul.f32 %v608, %v378
      %v682 = vsub.f32 %v680, %v681
      %s683 = scalar_lea.vmem %s324, 16
      %v684 = vld [vmem:[%s683] sm:$0xff]
      %685 = vmatprep.subr.mxu0 0.0
      %686 = vmatpush1.msra.mxu0 %v344
      %687 = vmatprep.subr.mxu0 0.0
      %688 = vmatpush1.msra.mxu0 %v345
      %689 = vmatprep.subr.mxu0 0.0
      %690 = vmatpush1.msra.mxu0 %v346
      %691 = vmatprep.subr.mxu0 0.0
      %692 = vmatpush1.msra.mxu0 %v347
      %693 = vmatprep.subr.mxu0 0.0
      %694 = vmatpush1.msra.mxu0 %v348
      %695 = vmatprep.subr.mxu0 0.0
      %696 = vmatpush1.msra.mxu0 %v349
      %697 = vmatprep.subr.mxu0 0.0
      %698 = vmatpush1.msra.mxu0 %v350
      %699 = vmatprep.subr.mxu0 0.0
      %700 = vmatpush1.msra.mxu0 %v351
      %701 = vmatprep.subr.mxu0 0.0
      %702 = vmatpush1.msra.mxu0 %v352
      %703 = vmatprep.subr.mxu0 0.0
      %704 = vmatpush1.msra.mxu0 %v353
      %705 = vmatprep.subr.mxu0 0.0
      %706 = vmatpush1.msra.mxu0 %v354
      %707 = vmatprep.subr.mxu0 0.0
      %708 = vmatpush1.msra.mxu0 %v355
      %709 = vmatprep.subr.mxu0 0.0
      %710 = vmatpush1.msra.mxu0 %v356
      %711 = vmatprep.subr.mxu0 0.0
      %712 = vmatpush1.msra.mxu0 %v357
      %713 = vmatprep.subr.mxu0 0.0
      %714 = vmatpush1.msra.mxu0 %v358
      %715 = vmatprep.subr.mxu0 0.0
      %716 = vmatpush1.msra.mxu0 %v359
      %717 = vmatprep.subr.mxu0 0.0
      %718 = vmatpush1.msra.mxu0 0.0
      %719 = vmatprep.subr.mxu0 0.0
      %720 = vmatpush1.msra.mxu0 0.0
      %721 = vmatprep.subr.mxu0 0.0
      %722 = vmatpush1.msra.mxu0 0.0
      %723 = vmatprep.subr.mxu0 0.0
      %724 = vmatpush1.msra.mxu0 0.0
      %725 = vmatprep.subr.mxu0 0.0
      %726 = vmatpush1.msra.mxu0 0.0
      %727 = vmatprep.subr.mxu0 0.0
      %728 = vmatpush1.msra.mxu0 0.0
      %729 = vmatprep.subr.mxu0 0.0
      %730 = vmatpush1.msra.mxu0 0.0
      %731 = vmatprep.subr.mxu0 0.0
      %732 = vmatpush1.msra.mxu0 0.0
      %733 = vmatprep.subr.mxu0 0.0
      %734 = vmatpush1.msra.mxu0 0.0
      %735 = vmatprep.subr.mxu0 0.0
      %736 = vmatpush1.msra.mxu0 0.0
      %737 = vmatprep.subr.mxu0 0.0
      %738 = vmatpush1.msra.mxu0 0.0
      %739 = vmatprep.subr.mxu0 0.0
      %740 = vmatpush1.msra.mxu0 0.0
      %741 = vmatprep.subr.mxu0 0.0
      %742 = vmatpush1.msra.mxu0 0.0
      %743 = vmatprep.subr.mxu0 0.0
      %744 = vmatpush1.msra.mxu0 0.0
      %745 = vmatprep.subr.mxu0 0.0
      %746 = vmatpush1.msra.mxu0 0.0
      %747 = vmatprep.subr.mxu0 0.0
      %748 = vmatpush1.msra.mxu0 0.0
      %749 = vmatprep.mubr.f32.mxu0 0.0
      %750 = vmatmul.mubr.f32.gmra.mrb[0].mxu0 %v682
      %v751 = vpop.f32.mrb[0].mxu0
      %v752 = vadd.f32 %v684, %v751
      %v753 = vpop.f32.mrb[0].mxu0
      %754 = vdwg.mxu0
      %v755 = vtanh.pop %v752
      %v756 = vmul.f32 %v755, %v755
      %v757 = vsub.f32 1.0, %v756
      %v758 = vmul.f32 %v757, %v376
      %759 = vadd.xlane.f32.xlu0 %v758
      %v760 = vpop.xlane.xlu0 %759
      %761 = vmatprep.subr.mxu0 0.0
      %762 = vmatpush1.msra.mxu0 %v360
      %763 = vmatprep.subr.mxu0 0.0
      %764 = vmatpush1.msra.mxu0 %v361
      %765 = vmatprep.subr.mxu0 0.0
      %766 = vmatpush1.msra.mxu0 %v362
      %767 = vmatprep.subr.mxu0 0.0
      %768 = vmatpush1.msra.mxu0 %v363
      %769 = vmatprep.subr.mxu0 0.0
      %770 = vmatpush1.msra.mxu0 %v364
      %771 = vmatprep.subr.mxu0 0.0
      %772 = vmatpush1.msra.mxu0 %v365
      %773 = vmatprep.subr.mxu0 0.0
      %774 = vmatpush1.msra.mxu0 %v366
      %775 = vmatprep.subr.mxu0 0.0
      %776 = vmatpush1.msra.mxu0 %v367
      %777 = vmatprep.subr.mxu0 0.0
      %778 = vmatpush1.msra.mxu0 %v368
      %779 = vmatprep.subr.mxu0 0.0
      %780 = vmatpush1.msra.mxu0 %v369
      %781 = vmatprep.subr.mxu0 0.0
      %782 = vmatpush1.msra.mxu0 %v370
      %783 = vmatprep.subr.mxu0 0.0
      %784 = vmatpush1.msra.mxu0 %v371
      %785 = vmatprep.subr.mxu0 0.0
      %786 = vmatpush1.msra.mxu0 %v372
      %787 = vmatprep.subr.mxu0 0.0
      %788 = vmatpush1.msra.mxu0 %v373
      %789 = vmatprep.subr.mxu0 0.0
      %790 = vmatpush1.msra.mxu0 %v374
      %791 = vmatprep.subr.mxu0 0.0
      %792 = vmatpush1.msra.mxu0 %v375
      %793 = vmatprep.subr.mxu0 0.0
      %794 = vmatpush1.msra.mxu0 0.0
      %795 = vmatprep.subr.mxu0 0.0
      %796 = vmatpush1.msra.mxu0 0.0
      %797 = vmatprep.subr.mxu0 0.0
      %798 = vmatpush1.msra.mxu0 0.0
      %799 = vmatprep.subr.mxu0 0.0
      %800 = vmatpush1.msra.mxu0 0.0
      %801 = vmatprep.subr.mxu0 0.0
      %802 = vmatpush1.msra.mxu0 0.0
      %803 = vmatprep.subr.mxu0 0.0
      %804 = vmatpush1.msra.mxu0 0.0
      %805 = vmatprep.subr.mxu0 0.0
      %806 = vmatpush1.msra.mxu0 0.0
      %807 = vmatprep.subr.mxu0 0.0
      %808 = vmatpush1.msra.mxu0 0.0
      %809 = vmatprep.subr.mxu0 0.0
      %810 = vmatpush1.msra.mxu0 0.0
      %811 = vmatprep.subr.mxu0 0.0
      %812 = vmatpush1.msra.mxu0 0.0
      %813 = vmatprep.subr.mxu0 0.0
      %814 = vmatpush1.msra.mxu0 0.0
      %815 = vmatprep.subr.mxu0 0.0
      %816 = vmatpush1.msra.mxu0 0.0
      %817 = vmatprep.subr.mxu0 0.0
      %818 = vmatpush1.msra.mxu0 0.0
      %819 = vmatprep.subr.mxu0 0.0
      %820 = vmatpush1.msra.mxu0 0.0
      %821 = vmatprep.subr.mxu0 0.0
      %822 = vmatpush1.msra.mxu0 0.0
      %823 = vmatprep.subr.mxu0 0.0
      %824 = vmatpush1.msra.mxu0 0.0
      %825 = vmatprep.mubr.f32.mxu0 0.0
      %826 = vmatmul.mubr.f32.gmra.mrb[0].mxu0 %v755
      %v827 = vpop.f32.mrb[0].mxu0
      %v828 = vadd.f32 0.0, %v827
      %v829 = vpop.f32.mrb[0].mxu0
      %830 = vdwg.mxu0
      %v831 = vadd.f32 %v682, %v828
      %v832 = vadd.f32 %v831, %v377
      %v833 = vmul.f32 %v760, %v378
      %v834 = vsub.f32 %v832, %v833
      %s835 = scalar_lea.vmem %s324, 24
      %v836 = vld [vmem:[%s835] sm:$0xff]
      %837 = vmatprep.subr.mxu0 0.0
      %838 = vmatpush1.msra.mxu0 %v344
      %839 = vmatprep.subr.mxu0 0.0
      %840 = vmatpush1.msra.mxu0 %v345
      %841 = vmatprep.subr.mxu0 0.0
      %842 = vmatpush1.msra.mxu0 %v346
      %843 = vmatprep.subr.mxu0 0.0
      %844 = vmatpush1.msra.mxu0 %v347
      %845 = vmatprep.subr.mxu0 0.0
      %846 = vmatpush1.msra.mxu0 %v348
      %847 = vmatprep.subr.mxu0 0.0
      %848 = vmatpush1.msra.mxu0 %v349
      %849 = vmatprep.subr.mxu0 0.0
      %850 = vmatpush1.msra.mxu0 %v350
      %851 = vmatprep.subr.mxu0 0.0
      %852 = vmatpush1.msra.mxu0 %v351
      %853 = vmatprep.subr.mxu0 0.0
      %854 = vmatpush1.msra.mxu0 %v352
      %855 = vmatprep.subr.mxu0 0.0
      %856 = vmatpush1.msra.mxu0 %v353
      %857 = vmatprep.subr.mxu0 0.0
      %858 = vmatpush1.msra.mxu0 %v354
      %859 = vmatprep.subr.mxu0 0.0
      %860 = vmatpush1.msra.mxu0 %v355
      %861 = vmatprep.subr.mxu0 0.0
      %862 = vmatpush1.msra.mxu0 %v356
      %863 = vmatprep.subr.mxu0 0.0
      %864 = vmatpush1.msra.mxu0 %v357
      %865 = vmatprep.subr.mxu0 0.0
      %866 = vmatpush1.msra.mxu0 %v358
      %867 = vmatprep.subr.mxu0 0.0
      %868 = vmatpush1.msra.mxu0 %v359
      %869 = vmatprep.subr.mxu0 0.0
      %870 = vmatpush1.msra.mxu0 0.0
      %871 = vmatprep.subr.mxu0 0.0
      %872 = vmatpush1.msra.mxu0 0.0
      %873 = vmatprep.subr.mxu0 0.0
      %874 = vmatpush1.msra.mxu0 0.0
      %875 = vmatprep.subr.mxu0 0.0
      %876 = vmatpush1.msra.mxu0 0.0
      %877 = vmatprep.subr.mxu0 0.0
      %878 = vmatpush1.msra.mxu0 0.0
      %879 = vmatprep.subr.mxu0 0.0
      %880 = vmatpush1.msra.mxu0 0.0
      %881 = vmatprep.subr.mxu0 0.0
      %882 = vmatpush1.msra.mxu0 0.0
      %883 = vmatprep.subr.mxu0 0.0
      %884 = vmatpush1.msra.mxu0 0.0
      %885 = vmatprep.subr.mxu0 0.0
      %886 = vmatpush1.msra.mxu0 0.0
      %887 = vmatprep.subr.mxu0 0.0
      %888 = vmatpush1.msra.mxu0 0.0
      %889 = vmatprep.subr.mxu0 0.0
      %890 = vmatpush1.msra.mxu0 0.0
      %891 = vmatprep.subr.mxu0 0.0
      %892 = vmatpush1.msra.mxu0 0.0
      %893 = vmatprep.subr.mxu0 0.0
      %894 = vmatpush1.msra.mxu0 0.0
      %895 = vmatprep.subr.mxu0 0.0
      %896 = vmatpush1.msra.mxu0 0.0
      %897 = vmatprep.subr.mxu0 0.0
      %898 = vmatpush1.msra.mxu0 0.0
      %899 = vmatprep.subr.mxu0 0.0
      %900 = vmatpush1.msra.mxu0 0.0
      %901 = vmatprep.mubr.f32.mxu0 0.0
      %902 = vmatmul.mubr.f32.gmra.mrb[0].mxu0 %v834
      %v903 = vpop.f32.mrb[0].mxu0
      %v904 = vadd.f32 %v836, %v903
      %v905 = vpop.f32.mrb[0].mxu0
      %906 = vdwg.mxu0
      %v907 = vtanh.pop %v904
      %v908 = vmul.f32 %v907, %v907
      %v909 = vsub.f32 1.0, %v908
      %v910 = vmul.f32 %v909, %v376
      %911 = vadd.xlane.f32.xlu0 %v910
      %v912 = vpop.xlane.xlu0 %911
      %913 = vmatprep.subr.mxu0 0.0
      %914 = vmatpush1.msra.mxu0 %v360
      %915 = vmatprep.subr.mxu0 0.0
      %916 = vmatpush1.msra.mxu0 %v361
      %917 = vmatprep.subr.mxu0 0.0
      %918 = vmatpush1.msra.mxu0 %v362
      %919 = vmatprep.subr.mxu0 0.0
      %920 = vmatpush1.msra.mxu0 %v363
      %921 = vmatprep.subr.mxu0 0.0
      %922 = vmatpush1.msra.mxu0 %v364
      %923 = vmatprep.subr.mxu0 0.0
      %924 = vmatpush1.msra.mxu0 %v365
      %925 = vmatprep.subr.mxu0 0.0
      %926 = vmatpush1.msra.mxu0 %v366
      %927 = vmatprep.subr.mxu0 0.0
      %928 = vmatpush1.msra.mxu0 %v367
      %929 = vmatprep.subr.mxu0 0.0
      %930 = vmatpush1.msra.mxu0 %v368
      %931 = vmatprep.subr.mxu0 0.0
      %932 = vmatpush1.msra.mxu0 %v369
      %933 = vmatprep.subr.mxu0 0.0
      %934 = vmatpush1.msra.mxu0 %v370
      %935 = vmatprep.subr.mxu0 0.0
      %936 = vmatpush1.msra.mxu0 %v371
      %937 = vmatprep.subr.mxu0 0.0
      %938 = vmatpush1.msra.mxu0 %v372
      %939 = vmatprep.subr.mxu0 0.0
      %940 = vmatpush1.msra.mxu0 %v373
      %941 = vmatprep.subr.mxu0 0.0
      %942 = vmatpush1.msra.mxu0 %v374
      %943 = vmatprep.subr.mxu0 0.0
      %944 = vmatpush1.msra.mxu0 %v375
      %945 = vmatprep.subr.mxu0 0.0
      %946 = vmatpush1.msra.mxu0 0.0
      %947 = vmatprep.subr.mxu0 0.0
      %948 = vmatpush1.msra.mxu0 0.0
      %949 = vmatprep.subr.mxu0 0.0
      %950 = vmatpush1.msra.mxu0 0.0
      %951 = vmatprep.subr.mxu0 0.0
      %952 = vmatpush1.msra.mxu0 0.0
      %953 = vmatprep.subr.mxu0 0.0
      %954 = vmatpush1.msra.mxu0 0.0
      %955 = vmatprep.subr.mxu0 0.0
      %956 = vmatpush1.msra.mxu0 0.0
      %957 = vmatprep.subr.mxu0 0.0
      %958 = vmatpush1.msra.mxu0 0.0
      %959 = vmatprep.subr.mxu0 0.0
      %960 = vmatpush1.msra.mxu0 0.0
      %961 = vmatprep.subr.mxu0 0.0
      %962 = vmatpush1.msra.mxu0 0.0
      %963 = vmatprep.subr.mxu0 0.0
      %964 = vmatpush1.msra.mxu0 0.0
      %965 = vmatprep.subr.mxu0 0.0
      %966 = vmatpush1.msra.mxu0 0.0
      %967 = vmatprep.subr.mxu0 0.0
      %968 = vmatpush1.msra.mxu0 0.0
      %969 = vmatprep.subr.mxu0 0.0
      %970 = vmatpush1.msra.mxu0 0.0
      %971 = vmatprep.subr.mxu0 0.0
      %972 = vmatpush1.msra.mxu0 0.0
      %973 = vmatprep.subr.mxu0 0.0
      %974 = vmatpush1.msra.mxu0 0.0
      %975 = vmatprep.subr.mxu0 0.0
      %976 = vmatpush1.msra.mxu0 0.0
      %977 = vmatprep.mubr.f32.mxu0 0.0
      %978 = vmatmul.mubr.f32.gmra.mrb[0].mxu0 %v907
      %v979 = vpop.f32.mrb[0].mxu0
      %v980 = vadd.f32 0.0, %v979
      %v981 = vpop.f32.mrb[0].mxu0
      %982 = vdwg.mxu0
      %v983 = vadd.f32 %v834, %v980
      %v984 = vadd.f32 %v983, %v377
      %v985 = vmul.f32 %v912, %v378
      %v986 = vsub.f32 %v984, %v985
      %s987 = scalar_lea.vmem %s324, 32
      %v988 = vld [vmem:[%s987] sm:$0xff]
      %989 = vmatprep.subr.mxu0 0.0
      %990 = vmatpush1.msra.mxu0 %v344
      %991 = vmatprep.subr.mxu0 0.0
      %992 = vmatpush1.msra.mxu0 %v345
      %993 = vmatprep.subr.mxu0 0.0
      %994 = vmatpush1.msra.mxu0 %v346
      %995 = vmatprep.subr.mxu0 0.0
      %996 = vmatpush1.msra.mxu0 %v347
      %997 = vmatprep.subr.mxu0 0.0
      %998 = vmatpush1.msra.mxu0 %v348
      %999 = vmatprep.subr.mxu0 0.0
      %1000 = vmatpush1.msra.mxu0 %v349
      %1001 = vmatprep.subr.mxu0 0.0
      %1002 = vmatpush1.msra.mxu0 %v350
      %1003 = vmatprep.subr.mxu0 0.0
      %1004 = vmatpush1.msra.mxu0 %v351
      %1005 = vmatprep.subr.mxu0 0.0
      %1006 = vmatpush1.msra.mxu0 %v352
      %1007 = vmatprep.subr.mxu0 0.0
      %1008 = vmatpush1.msra.mxu0 %v353
      %1009 = vmatprep.subr.mxu0 0.0
      %1010 = vmatpush1.msra.mxu0 %v354
      %1011 = vmatprep.subr.mxu0 0.0
      %1012 = vmatpush1.msra.mxu0 %v355
      %1013 = vmatprep.subr.mxu0 0.0
      %1014 = vmatpush1.msra.mxu0 %v356
      %1015 = vmatprep.subr.mxu0 0.0
      %1016 = vmatpush1.msra.mxu0 %v357
      %1017 = vmatprep.subr.mxu0 0.0
      %1018 = vmatpush1.msra.mxu0 %v358
      %1019 = vmatprep.subr.mxu0 0.0
      %1020 = vmatpush1.msra.mxu0 %v359
      %1021 = vmatprep.subr.mxu0 0.0
      %1022 = vmatpush1.msra.mxu0 0.0
      %1023 = vmatprep.subr.mxu0 0.0
      %1024 = vmatpush1.msra.mxu0 0.0
      %1025 = vmatprep.subr.mxu0 0.0
      %1026 = vmatpush1.msra.mxu0 0.0
      %1027 = vmatprep.subr.mxu0 0.0
      %1028 = vmatpush1.msra.mxu0 0.0
      %1029 = vmatprep.subr.mxu0 0.0
      %1030 = vmatpush1.msra.mxu0 0.0
      %1031 = vmatprep.subr.mxu0 0.0
      %1032 = vmatpush1.msra.mxu0 0.0
      %1033 = vmatprep.subr.mxu0 0.0
      %1034 = vmatpush1.msra.mxu0 0.0
      %1035 = vmatprep.subr.mxu0 0.0
      %1036 = vmatpush1.msra.mxu0 0.0
      %1037 = vmatprep.subr.mxu0 0.0
      %1038 = vmatpush1.msra.mxu0 0.0
      %1039 = vmatprep.subr.mxu0 0.0
      %1040 = vmatpush1.msra.mxu0 0.0
      %1041 = vmatprep.subr.mxu0 0.0
      %1042 = vmatpush1.msra.mxu0 0.0
      %1043 = vmatprep.subr.mxu0 0.0
      %1044 = vmatpush1.msra.mxu0 0.0
      %1045 = vmatprep.subr.mxu0 0.0
      %1046 = vmatpush1.msra.mxu0 0.0
      %1047 = vmatprep.subr.mxu0 0.0
      %1048 = vmatpush1.msra.mxu0 0.0
      %1049 = vmatprep.subr.mxu0 0.0
      %1050 = vmatpush1.msra.mxu0 0.0
      %1051 = vmatprep.subr.mxu0 0.0
      %1052 = vmatpush1.msra.mxu0 0.0
      %1053 = vmatprep.mubr.f32.mxu0 0.0
      %1054 = vmatmul.mubr.f32.gmra.mrb[0].mxu0 %v986
      %v1055 = vpop.f32.mrb[0].mxu0
      %v1056 = vadd.f32 %v988, %v1055
      %v1057 = vpop.f32.mrb[0].mxu0
      %1058 = vdwg.mxu0
      %v1059 = vtanh.pop %v1056
      %v1060 = vmul.f32 %v1059, %v1059
      %v1061 = vsub.f32 1.0, %v1060
      %v1062 = vmul.f32 %v1061, %v376
      %1063 = vadd.xlane.f32.xlu0 %v1062
      %v1064 = vpop.xlane.xlu0 %1063
      %1065 = vmatprep.subr.mxu0 0.0
      %1066 = vmatpush1.msra.mxu0 %v360
      %1067 = vmatprep.subr.mxu0 0.0
      %1068 = vmatpush1.msra.mxu0 %v361
      %1069 = vmatprep.subr.mxu0 0.0
      %1070 = vmatpush1.msra.mxu0 %v362
      %1071 = vmatprep.subr.mxu0 0.0
      %1072 = vmatpush1.msra.mxu0 %v363
      %1073 = vmatprep.subr.mxu0 0.0
      %1074 = vmatpush1.msra.mxu0 %v364
      %1075 = vmatprep.subr.mxu0 0.0
      %1076 = vmatpush1.msra.mxu0 %v365
      %1077 = vmatprep.subr.mxu0 0.0
      %1078 = vmatpush1.msra.mxu0 %v366
      %1079 = vmatprep.subr.mxu0 0.0
      %1080 = vmatpush1.msra.mxu0 %v367
      %1081 = vmatprep.subr.mxu0 0.0
      %1082 = vmatpush1.msra.mxu0 %v368
      %1083 = vmatprep.subr.mxu0 0.0
      %1084 = vmatpush1.msra.mxu0 %v369
      %1085 = vmatprep.subr.mxu0 0.0
      %1086 = vmatpush1.msra.mxu0 %v370
      %1087 = vmatprep.subr.mxu0 0.0
      %1088 = vmatpush1.msra.mxu0 %v371
      %1089 = vmatprep.subr.mxu0 0.0
      %1090 = vmatpush1.msra.mxu0 %v372
      %1091 = vmatprep.subr.mxu0 0.0
      %1092 = vmatpush1.msra.mxu0 %v373
      %1093 = vmatprep.subr.mxu0 0.0
      %1094 = vmatpush1.msra.mxu0 %v374
      %1095 = vmatprep.subr.mxu0 0.0
      %1096 = vmatpush1.msra.mxu0 %v375
      %1097 = vmatprep.subr.mxu0 0.0
      %1098 = vmatpush1.msra.mxu0 0.0
      %1099 = vmatprep.subr.mxu0 0.0
      %1100 = vmatpush1.msra.mxu0 0.0
      %1101 = vmatprep.subr.mxu0 0.0
      %1102 = vmatpush1.msra.mxu0 0.0
      %1103 = vmatprep.subr.mxu0 0.0
      %1104 = vmatpush1.msra.mxu0 0.0
      %1105 = vmatprep.subr.mxu0 0.0
      %1106 = vmatpush1.msra.mxu0 0.0
      %1107 = vmatprep.subr.mxu0 0.0
      %1108 = vmatpush1.msra.mxu0 0.0
      %1109 = vmatprep.subr.mxu0 0.0
      %1110 = vmatpush1.msra.mxu0 0.0
      %1111 = vmatprep.subr.mxu0 0.0
      %1112 = vmatpush1.msra.mxu0 0.0
      %1113 = vmatprep.subr.mxu0 0.0
      %1114 = vmatpush1.msra.mxu0 0.0
      %1115 = vmatprep.subr.mxu0 0.0
      %1116 = vmatpush1.msra.mxu0 0.0
      %1117 = vmatprep.subr.mxu0 0.0
      %1118 = vmatpush1.msra.mxu0 0.0
      %1119 = vmatprep.subr.mxu0 0.0
      %1120 = vmatpush1.msra.mxu0 0.0
      %1121 = vmatprep.subr.mxu0 0.0
      %1122 = vmatpush1.msra.mxu0 0.0
      %1123 = vmatprep.subr.mxu0 0.0
      %1124 = vmatpush1.msra.mxu0 0.0
      %1125 = vmatprep.subr.mxu0 0.0
      %1126 = vmatpush1.msra.mxu0 0.0
      %1127 = vmatprep.subr.mxu0 0.0
      %1128 = vmatpush1.msra.mxu0 0.0
      %1129 = vmatprep.mubr.f32.mxu0 0.0
      %1130 = vmatmul.mubr.f32.gmra.mrb[0].mxu0 %v1059
      %v1131 = vpop.f32.mrb[0].mxu0
      %v1132 = vadd.f32 0.0, %v1131
      %v1133 = vpop.f32.mrb[0].mxu0
      %1134 = vdwg.mxu0
      %v1135 = vadd.f32 %v986, %v1132
      %v1136 = vadd.f32 %v1135, %v377
      %v1137 = vmul.f32 %v1064, %v378
      %v1138 = vsub.f32 %v1136, %v1137
      %s1139 = scalar_lea.vmem %s324, 40
      %v1140 = vld [vmem:[%s1139] sm:$0xff]
      %1141 = vmatprep.subr.mxu0 0.0
      %1142 = vmatpush1.msra.mxu0 %v344
      %1143 = vmatprep.subr.mxu0 0.0
      %1144 = vmatpush1.msra.mxu0 %v345
      %1145 = vmatprep.subr.mxu0 0.0
      %1146 = vmatpush1.msra.mxu0 %v346
      %1147 = vmatprep.subr.mxu0 0.0
      %1148 = vmatpush1.msra.mxu0 %v347
      %1149 = vmatprep.subr.mxu0 0.0
      %1150 = vmatpush1.msra.mxu0 %v348
      %1151 = vmatprep.subr.mxu0 0.0
      %1152 = vmatpush1.msra.mxu0 %v349
      %1153 = vmatprep.subr.mxu0 0.0
      %1154 = vmatpush1.msra.mxu0 %v350
      %1155 = vmatprep.subr.mxu0 0.0
      %1156 = vmatpush1.msra.mxu0 %v351
      %1157 = vmatprep.subr.mxu0 0.0
      %1158 = vmatpush1.msra.mxu0 %v352
      %1159 = vmatprep.subr.mxu0 0.0
      %1160 = vmatpush1.msra.mxu0 %v353
      %1161 = vmatprep.subr.mxu0 0.0
      %1162 = vmatpush1.msra.mxu0 %v354
      %1163 = vmatprep.subr.mxu0 0.0
      %1164 = vmatpush1.msra.mxu0 %v355
      %1165 = vmatprep.subr.mxu0 0.0
      %1166 = vmatpush1.msra.mxu0 %v356
      %1167 = vmatprep.subr.mxu0 0.0
      %1168 = vmatpush1.msra.mxu0 %v357
      %1169 = vmatprep.subr.mxu0 0.0
      %1170 = vmatpush1.msra.mxu0 %v358
      %1171 = vmatprep.subr.mxu0 0.0
      %1172 = vmatpush1.msra.mxu0 %v359
      %1173 = vmatprep.subr.mxu0 0.0
      %1174 = vmatpush1.msra.mxu0 0.0
      %1175 = vmatprep.subr.mxu0 0.0
      %1176 = vmatpush1.msra.mxu0 0.0
      %1177 = vmatprep.subr.mxu0 0.0
      %1178 = vmatpush1.msra.mxu0 0.0
      %1179 = vmatprep.subr.mxu0 0.0
      %1180 = vmatpush1.msra.mxu0 0.0
      %1181 = vmatprep.subr.mxu0 0.0
      %1182 = vmatpush1.msra.mxu0 0.0
      %1183 = vmatprep.subr.mxu0 0.0
      %1184 = vmatpush1.msra.mxu0 0.0
      %1185 = vmatprep.subr.mxu0 0.0
      %1186 = vmatpush1.msra.mxu0 0.0
      %1187 = vmatprep.subr.mxu0 0.0
      %1188 = vmatpush1.msra.mxu0 0.0
      %1189 = vmatprep.subr.mxu0 0.0
      %1190 = vmatpush1.msra.mxu0 0.0
      %1191 = vmatprep.subr.mxu0 0.0
      %1192 = vmatpush1.msra.mxu0 0.0
      %1193 = vmatprep.subr.mxu0 0.0
      %1194 = vmatpush1.msra.mxu0 0.0
      %1195 = vmatprep.subr.mxu0 0.0
      %1196 = vmatpush1.msra.mxu0 0.0
      %1197 = vmatprep.subr.mxu0 0.0
      %1198 = vmatpush1.msra.mxu0 0.0
      %1199 = vmatprep.subr.mxu0 0.0
      %1200 = vmatpush1.msra.mxu0 0.0
      %1201 = vmatprep.subr.mxu0 0.0
      %1202 = vmatpush1.msra.mxu0 0.0
      %1203 = vmatprep.subr.mxu0 0.0
      %1204 = vmatpush1.msra.mxu0 0.0
      %1205 = vmatprep.mubr.f32.mxu0 0.0
      %1206 = vmatmul.mubr.f32.gmra.mrb[0].mxu0 %v1138
      %v1207 = vpop.f32.mrb[0].mxu0
      %v1208 = vadd.f32 %v1140, %v1207
      %v1209 = vpop.f32.mrb[0].mxu0
      %1210 = vdwg.mxu0
      %v1211 = vtanh.pop %v1208
      %v1212 = vmul.f32 %v1211, %v1211
      %v1213 = vsub.f32 1.0, %v1212
      %v1214 = vmul.f32 %v1213, %v376
      %1215 = vadd.xlane.f32.xlu0 %v1214
      %v1216 = vpop.xlane.xlu0 %1215
      %1217 = vmatprep.subr.mxu0 0.0
      %1218 = vmatpush1.msra.mxu0 %v360
      %1219 = vmatprep.subr.mxu0 0.0
      %1220 = vmatpush1.msra.mxu0 %v361
      %1221 = vmatprep.subr.mxu0 0.0
      %1222 = vmatpush1.msra.mxu0 %v362
      %1223 = vmatprep.subr.mxu0 0.0
      %1224 = vmatpush1.msra.mxu0 %v363
      %1225 = vmatprep.subr.mxu0 0.0
      %1226 = vmatpush1.msra.mxu0 %v364
      %1227 = vmatprep.subr.mxu0 0.0
      %1228 = vmatpush1.msra.mxu0 %v365
      %1229 = vmatprep.subr.mxu0 0.0
      %1230 = vmatpush1.msra.mxu0 %v366
      %1231 = vmatprep.subr.mxu0 0.0
      %1232 = vmatpush1.msra.mxu0 %v367
      %1233 = vmatprep.subr.mxu0 0.0
      %1234 = vmatpush1.msra.mxu0 %v368
      %1235 = vmatprep.subr.mxu0 0.0
      %1236 = vmatpush1.msra.mxu0 %v369
      %1237 = vmatprep.subr.mxu0 0.0
      %1238 = vmatpush1.msra.mxu0 %v370
      %1239 = vmatprep.subr.mxu0 0.0
      %1240 = vmatpush1.msra.mxu0 %v371
      %1241 = vmatprep.subr.mxu0 0.0
      %1242 = vmatpush1.msra.mxu0 %v372
      %1243 = vmatprep.subr.mxu0 0.0
      %1244 = vmatpush1.msra.mxu0 %v373
      %1245 = vmatprep.subr.mxu0 0.0
      %1246 = vmatpush1.msra.mxu0 %v374
      %1247 = vmatprep.subr.mxu0 0.0
      %1248 = vmatpush1.msra.mxu0 %v375
      %1249 = vmatprep.subr.mxu0 0.0
      %1250 = vmatpush1.msra.mxu0 0.0
      %1251 = vmatprep.subr.mxu0 0.0
      %1252 = vmatpush1.msra.mxu0 0.0
      %1253 = vmatprep.subr.mxu0 0.0
      %1254 = vmatpush1.msra.mxu0 0.0
      %1255 = vmatprep.subr.mxu0 0.0
      %1256 = vmatpush1.msra.mxu0 0.0
      %1257 = vmatprep.subr.mxu0 0.0
      %1258 = vmatpush1.msra.mxu0 0.0
      %1259 = vmatprep.subr.mxu0 0.0
      %1260 = vmatpush1.msra.mxu0 0.0
      %1261 = vmatprep.subr.mxu0 0.0
      %1262 = vmatpush1.msra.mxu0 0.0
      %1263 = vmatprep.subr.mxu0 0.0
      %1264 = vmatpush1.msra.mxu0 0.0
      %1265 = vmatprep.subr.mxu0 0.0
      %1266 = vmatpush1.msra.mxu0 0.0
      %1267 = vmatprep.subr.mxu0 0.0
      %1268 = vmatpush1.msra.mxu0 0.0
      %1269 = vmatprep.subr.mxu0 0.0
      %1270 = vmatpush1.msra.mxu0 0.0
      %1271 = vmatprep.subr.mxu0 0.0
      %1272 = vmatpush1.msra.mxu0 0.0
      %1273 = vmatprep.subr.mxu0 0.0
      %1274 = vmatpush1.msra.mxu0 0.0
      %1275 = vmatprep.subr.mxu0 0.0
      %1276 = vmatpush1.msra.mxu0 0.0
      %1277 = vmatprep.subr.mxu0 0.0
      %1278 = vmatpush1.msra.mxu0 0.0
      %1279 = vmatprep.subr.mxu0 0.0
      %1280 = vmatpush1.msra.mxu0 0.0
      %1281 = vmatprep.mubr.f32.mxu0 0.0
      %1282 = vmatmul.mubr.f32.gmra.mrb[0].mxu0 %v1211
      %v1283 = vpop.f32.mrb[0].mxu0
      %v1284 = vadd.f32 0.0, %v1283
      %v1285 = vpop.f32.mrb[0].mxu0
      %1286 = vdwg.mxu0
      %v1287 = vadd.f32 %v1138, %v1284
      %v1288 = vadd.f32 %v1287, %v377
      %v1289 = vmul.f32 %v1216, %v378
      %v1290 = vsub.f32 %v1288, %v1289
      %s1291 = scalar_lea.vmem %s324, 48
      %v1292 = vld [vmem:[%s1291] sm:$0xff]
      %1293 = vmatprep.subr.mxu0 0.0
      %1294 = vmatpush1.msra.mxu0 %v344
      %1295 = vmatprep.subr.mxu0 0.0
      %1296 = vmatpush1.msra.mxu0 %v345
      %1297 = vmatprep.subr.mxu0 0.0
      %1298 = vmatpush1.msra.mxu0 %v346
      %1299 = vmatprep.subr.mxu0 0.0
      %1300 = vmatpush1.msra.mxu0 %v347
      %1301 = vmatprep.subr.mxu0 0.0
      %1302 = vmatpush1.msra.mxu0 %v348
      %1303 = vmatprep.subr.mxu0 0.0
      %1304 = vmatpush1.msra.mxu0 %v349
      %1305 = vmatprep.subr.mxu0 0.0
      %1306 = vmatpush1.msra.mxu0 %v350
      %1307 = vmatprep.subr.mxu0 0.0
      %1308 = vmatpush1.msra.mxu0 %v351
      %1309 = vmatprep.subr.mxu0 0.0
      %1310 = vmatpush1.msra.mxu0 %v352
      %1311 = vmatprep.subr.mxu0 0.0
      %1312 = vmatpush1.msra.mxu0 %v353
      %1313 = vmatprep.subr.mxu0 0.0
      %1314 = vmatpush1.msra.mxu0 %v354
      %1315 = vmatprep.subr.mxu0 0.0
      %1316 = vmatpush1.msra.mxu0 %v355
      %1317 = vmatprep.subr.mxu0 0.0
      %1318 = vmatpush1.msra.mxu0 %v356
      %1319 = vmatprep.subr.mxu0 0.0
      %1320 = vmatpush1.msra.mxu0 %v357
      %1321 = vmatprep.subr.mxu0 0.0
      %1322 = vmatpush1.msra.mxu0 %v358
      %1323 = vmatprep.subr.mxu0 0.0
      %1324 = vmatpush1.msra.mxu0 %v359
      %1325 = vmatprep.subr.mxu0 0.0
      %1326 = vmatpush1.msra.mxu0 0.0
      %1327 = vmatprep.subr.mxu0 0.0
      %1328 = vmatpush1.msra.mxu0 0.0
      %1329 = vmatprep.subr.mxu0 0.0
      %1330 = vmatpush1.msra.mxu0 0.0
      %1331 = vmatprep.subr.mxu0 0.0
      %1332 = vmatpush1.msra.mxu0 0.0
      %1333 = vmatprep.subr.mxu0 0.0
      %1334 = vmatpush1.msra.mxu0 0.0
      %1335 = vmatprep.subr.mxu0 0.0
      %1336 = vmatpush1.msra.mxu0 0.0
      %1337 = vmatprep.subr.mxu0 0.0
      %1338 = vmatpush1.msra.mxu0 0.0
      %1339 = vmatprep.subr.mxu0 0.0
      %1340 = vmatpush1.msra.mxu0 0.0
      %1341 = vmatprep.subr.mxu0 0.0
      %1342 = vmatpush1.msra.mxu0 0.0
      %1343 = vmatprep.subr.mxu0 0.0
      %1344 = vmatpush1.msra.mxu0 0.0
      %1345 = vmatprep.subr.mxu0 0.0
      %1346 = vmatpush1.msra.mxu0 0.0
      %1347 = vmatprep.subr.mxu0 0.0
      %1348 = vmatpush1.msra.mxu0 0.0
      %1349 = vmatprep.subr.mxu0 0.0
      %1350 = vmatpush1.msra.mxu0 0.0
      %1351 = vmatprep.subr.mxu0 0.0
      %1352 = vmatpush1.msra.mxu0 0.0
      %1353 = vmatprep.subr.mxu0 0.0
      %1354 = vmatpush1.msra.mxu0 0.0
      %1355 = vmatprep.subr.mxu0 0.0
      %1356 = vmatpush1.msra.mxu0 0.0
      %1357 = vmatprep.mubr.f32.mxu0 0.0
      %1358 = vmatmul.mubr.f32.gmra.mrb[0].mxu0 %v1290
      %v1359 = vpop.f32.mrb[0].mxu0
      %v1360 = vadd.f32 %v1292, %v1359
      %v1361 = vpop.f32.mrb[0].mxu0
      %1362 = vdwg.mxu0
      %v1363 = vtanh.pop %v1360
      %v1364 = vmul.f32 %v1363, %v1363
      %v1365 = vsub.f32 1.0, %v1364
      %v1366 = vmul.f32 %v1365, %v376
      %1367 = vadd.xlane.f32.xlu0 %v1366
      %v1368 = vpop.xlane.xlu0 %1367
      %1369 = vmatprep.subr.mxu0 0.0
      %1370 = vmatpush1.msra.mxu0 %v360
      %1371 = vmatprep.subr.mxu0 0.0
      %1372 = vmatpush1.msra.mxu0 %v361
      %1373 = vmatprep.subr.mxu0 0.0
      %1374 = vmatpush1.msra.mxu0 %v362
      %1375 = vmatprep.subr.mxu0 0.0
      %1376 = vmatpush1.msra.mxu0 %v363
      %1377 = vmatprep.subr.mxu0 0.0
      %1378 = vmatpush1.msra.mxu0 %v364
      %1379 = vmatprep.subr.mxu0 0.0
      %1380 = vmatpush1.msra.mxu0 %v365
      %1381 = vmatprep.subr.mxu0 0.0
      %1382 = vmatpush1.msra.mxu0 %v366
      %1383 = vmatprep.subr.mxu0 0.0
      %1384 = vmatpush1.msra.mxu0 %v367
      %1385 = vmatprep.subr.mxu0 0.0
      %1386 = vmatpush1.msra.mxu0 %v368
      %1387 = vmatprep.subr.mxu0 0.0
      %1388 = vmatpush1.msra.mxu0 %v369
      %1389 = vmatprep.subr.mxu0 0.0
      %1390 = vmatpush1.msra.mxu0 %v370
      %1391 = vmatprep.subr.mxu0 0.0
      %1392 = vmatpush1.msra.mxu0 %v371
      %1393 = vmatprep.subr.mxu0 0.0
      %1394 = vmatpush1.msra.mxu0 %v372
      %1395 = vmatprep.subr.mxu0 0.0
      %1396 = vmatpush1.msra.mxu0 %v373
      %1397 = vmatprep.subr.mxu0 0.0
      %1398 = vmatpush1.msra.mxu0 %v374
      %1399 = vmatprep.subr.mxu0 0.0
      %1400 = vmatpush1.msra.mxu0 %v375
      %1401 = vmatprep.subr.mxu0 0.0
      %1402 = vmatpush1.msra.mxu0 0.0
      %1403 = vmatprep.subr.mxu0 0.0
      %1404 = vmatpush1.msra.mxu0 0.0
      %1405 = vmatprep.subr.mxu0 0.0
      %1406 = vmatpush1.msra.mxu0 0.0
      %1407 = vmatprep.subr.mxu0 0.0
      %1408 = vmatpush1.msra.mxu0 0.0
      %1409 = vmatprep.subr.mxu0 0.0
      %1410 = vmatpush1.msra.mxu0 0.0
      %1411 = vmatprep.subr.mxu0 0.0
      %1412 = vmatpush1.msra.mxu0 0.0
      %1413 = vmatprep.subr.mxu0 0.0
      %1414 = vmatpush1.msra.mxu0 0.0
      %1415 = vmatprep.subr.mxu0 0.0
      %1416 = vmatpush1.msra.mxu0 0.0
      %1417 = vmatprep.subr.mxu0 0.0
      %1418 = vmatpush1.msra.mxu0 0.0
      %1419 = vmatprep.subr.mxu0 0.0
      %1420 = vmatpush1.msra.mxu0 0.0
      %1421 = vmatprep.subr.mxu0 0.0
      %1422 = vmatpush1.msra.mxu0 0.0
      %1423 = vmatprep.subr.mxu0 0.0
      %1424 = vmatpush1.msra.mxu0 0.0
      %1425 = vmatprep.subr.mxu0 0.0
      %1426 = vmatpush1.msra.mxu0 0.0
      %1427 = vmatprep.subr.mxu0 0.0
      %1428 = vmatpush1.msra.mxu0 0.0
      %1429 = vmatprep.subr.mxu0 0.0
      %1430 = vmatpush1.msra.mxu0 0.0
      %1431 = vmatprep.subr.mxu0 0.0
      %1432 = vmatpush1.msra.mxu0 0.0
      %1433 = vmatprep.mubr.f32.mxu0 0.0
      %1434 = vmatmul.mubr.f32.gmra.mrb[0].mxu0 %v1363
      %v1435 = vpop.f32.mrb[0].mxu0
      %v1436 = vadd.f32 0.0, %v1435
      %v1437 = vpop.f32.mrb[0].mxu0
      %1438 = vdwg.mxu0
      %v1439 = vadd.f32 %v1290, %v1436
      %v1440 = vadd.f32 %v1439, %v377
      %v1441 = vmul.f32 %v1368, %v378
      %v1442 = vsub.f32 %v1440, %v1441
      %s1443 = scalar_lea.vmem %s324, 56
      %v1444 = vld [vmem:[%s1443] sm:$0xff]
      %1445 = vmatprep.subr.mxu0 0.0
      %1446 = vmatpush1.msra.mxu0 %v344
      %1447 = vmatprep.subr.mxu0 0.0
      %1448 = vmatpush1.msra.mxu0 %v345
      %1449 = vmatprep.subr.mxu0 0.0
      %1450 = vmatpush1.msra.mxu0 %v346
      %1451 = vmatprep.subr.mxu0 0.0
      %1452 = vmatpush1.msra.mxu0 %v347
      %1453 = vmatprep.subr.mxu0 0.0
      %1454 = vmatpush1.msra.mxu0 %v348
      %1455 = vmatprep.subr.mxu0 0.0
      %1456 = vmatpush1.msra.mxu0 %v349
      %1457 = vmatprep.subr.mxu0 0.0
      %1458 = vmatpush1.msra.mxu0 %v350
      %1459 = vmatprep.subr.mxu0 0.0
      %1460 = vmatpush1.msra.mxu0 %v351
      %1461 = vmatprep.subr.mxu0 0.0
      %1462 = vmatpush1.msra.mxu0 %v352
      %1463 = vmatprep.subr.mxu0 0.0
      %1464 = vmatpush1.msra.mxu0 %v353
      %1465 = vmatprep.subr.mxu0 0.0
      %1466 = vmatpush1.msra.mxu0 %v354
      %1467 = vmatprep.subr.mxu0 0.0
      %1468 = vmatpush1.msra.mxu0 %v355
      %1469 = vmatprep.subr.mxu0 0.0
      %1470 = vmatpush1.msra.mxu0 %v356
      %1471 = vmatprep.subr.mxu0 0.0
      %1472 = vmatpush1.msra.mxu0 %v357
      %1473 = vmatprep.subr.mxu0 0.0
      %1474 = vmatpush1.msra.mxu0 %v358
      %1475 = vmatprep.subr.mxu0 0.0
      %1476 = vmatpush1.msra.mxu0 %v359
      %1477 = vmatprep.subr.mxu0 0.0
      %1478 = vmatpush1.msra.mxu0 0.0
      %1479 = vmatprep.subr.mxu0 0.0
      %1480 = vmatpush1.msra.mxu0 0.0
      %1481 = vmatprep.subr.mxu0 0.0
      %1482 = vmatpush1.msra.mxu0 0.0
      %1483 = vmatprep.subr.mxu0 0.0
      %1484 = vmatpush1.msra.mxu0 0.0
      %1485 = vmatprep.subr.mxu0 0.0
      %1486 = vmatpush1.msra.mxu0 0.0
      %1487 = vmatprep.subr.mxu0 0.0
      %1488 = vmatpush1.msra.mxu0 0.0
      %1489 = vmatprep.subr.mxu0 0.0
      %1490 = vmatpush1.msra.mxu0 0.0
      %1491 = vmatprep.subr.mxu0 0.0
      %1492 = vmatpush1.msra.mxu0 0.0
      %1493 = vmatprep.subr.mxu0 0.0
      %1494 = vmatpush1.msra.mxu0 0.0
      %1495 = vmatprep.subr.mxu0 0.0
      %1496 = vmatpush1.msra.mxu0 0.0
      %1497 = vmatprep.subr.mxu0 0.0
      %1498 = vmatpush1.msra.mxu0 0.0
      %1499 = vmatprep.subr.mxu0 0.0
      %1500 = vmatpush1.msra.mxu0 0.0
      %1501 = vmatprep.subr.mxu0 0.0
      %1502 = vmatpush1.msra.mxu0 0.0
      %1503 = vmatprep.subr.mxu0 0.0
      %1504 = vmatpush1.msra.mxu0 0.0
      %1505 = vmatprep.subr.mxu0 0.0
      %1506 = vmatpush1.msra.mxu0 0.0
      %1507 = vmatprep.subr.mxu0 0.0
      %1508 = vmatpush1.msra.mxu0 0.0
      %1509 = vmatprep.mubr.f32.mxu0 0.0
      %1510 = vmatmul.mubr.f32.gmra.mrb[0].mxu0 %v1442
      %v1511 = vpop.f32.mrb[0].mxu0
      %v1512 = vadd.f32 %v1444, %v1511
      %v1513 = vpop.f32.mrb[0].mxu0
      %1514 = vdwg.mxu0
      %v1515 = vtanh.pop %v1512
      %v1516 = vmul.f32 %v1515, %v1515
      %v1517 = vsub.f32 1.0, %v1516
      %v1518 = vmul.f32 %v1517, %v376
      %1519 = vadd.xlane.f32.xlu0 %v1518
      %v1520 = vpop.xlane.xlu0 %1519
      %1521 = vmatprep.subr.mxu0 0.0
      %1522 = vmatpush1.msra.mxu0 %v360
      %1523 = vmatprep.subr.mxu0 0.0
      %1524 = vmatpush1.msra.mxu0 %v361
      %1525 = vmatprep.subr.mxu0 0.0
      %1526 = vmatpush1.msra.mxu0 %v362
      %1527 = vmatprep.subr.mxu0 0.0
      %1528 = vmatpush1.msra.mxu0 %v363
      %1529 = vmatprep.subr.mxu0 0.0
      %1530 = vmatpush1.msra.mxu0 %v364
      %1531 = vmatprep.subr.mxu0 0.0
      %1532 = vmatpush1.msra.mxu0 %v365
      %1533 = vmatprep.subr.mxu0 0.0
      %1534 = vmatpush1.msra.mxu0 %v366
      %1535 = vmatprep.subr.mxu0 0.0
      %1536 = vmatpush1.msra.mxu0 %v367
      %1537 = vmatprep.subr.mxu0 0.0
      %1538 = vmatpush1.msra.mxu0 %v368
      %1539 = vmatprep.subr.mxu0 0.0
      %1540 = vmatpush1.msra.mxu0 %v369
      %1541 = vmatprep.subr.mxu0 0.0
      %1542 = vmatpush1.msra.mxu0 %v370
      %1543 = vmatprep.subr.mxu0 0.0
      %1544 = vmatpush1.msra.mxu0 %v371
      %1545 = vmatprep.subr.mxu0 0.0
      %1546 = vmatpush1.msra.mxu0 %v372
      %1547 = vmatprep.subr.mxu0 0.0
      %1548 = vmatpush1.msra.mxu0 %v373
      %1549 = vmatprep.subr.mxu0 0.0
      %1550 = vmatpush1.msra.mxu0 %v374
      %1551 = vmatprep.subr.mxu0 0.0
      %1552 = vmatpush1.msra.mxu0 %v375
      %1553 = vmatprep.subr.mxu0 0.0
      %1554 = vmatpush1.msra.mxu0 0.0
      %1555 = vmatprep.subr.mxu0 0.0
      %1556 = vmatpush1.msra.mxu0 0.0
      %1557 = vmatprep.subr.mxu0 0.0
      %1558 = vmatpush1.msra.mxu0 0.0
      %1559 = vmatprep.subr.mxu0 0.0
      %1560 = vmatpush1.msra.mxu0 0.0
      %1561 = vmatprep.subr.mxu0 0.0
      %1562 = vmatpush1.msra.mxu0 0.0
      %1563 = vmatprep.subr.mxu0 0.0
      %1564 = vmatpush1.msra.mxu0 0.0
      %1565 = vmatprep.subr.mxu0 0.0
      %1566 = vmatpush1.msra.mxu0 0.0
      %1567 = vmatprep.subr.mxu0 0.0
      %1568 = vmatpush1.msra.mxu0 0.0
      %1569 = vmatprep.subr.mxu0 0.0
      %1570 = vmatpush1.msra.mxu0 0.0
      %1571 = vmatprep.subr.mxu0 0.0
      %1572 = vmatpush1.msra.mxu0 0.0
      %1573 = vmatprep.subr.mxu0 0.0
      %1574 = vmatpush1.msra.mxu0 0.0
      %1575 = vmatprep.subr.mxu0 0.0
      %1576 = vmatpush1.msra.mxu0 0.0
      %1577 = vmatprep.subr.mxu0 0.0
      %1578 = vmatpush1.msra.mxu0 0.0
      %1579 = vmatprep.subr.mxu0 0.0
      %1580 = vmatpush1.msra.mxu0 0.0
      %1581 = vmatprep.subr.mxu0 0.0
      %1582 = vmatpush1.msra.mxu0 0.0
      %1583 = vmatprep.subr.mxu0 0.0
      %1584 = vmatpush1.msra.mxu0 0.0
      %1585 = vmatprep.mubr.f32.mxu0 0.0
      %1586 = vmatmul.mubr.f32.gmra.mrb[0].mxu0 %v1515
      %v1587 = vpop.f32.mrb[0].mxu0
      %v1588 = vadd.f32 0.0, %v1587
      %v1589 = vpop.f32.mrb[0].mxu0
      %1590 = vdwg.mxu0
      %v1591 = vadd.f32 %v1442, %v1588
      %v1592 = vadd.f32 %v1591, %v377
      %v1593 = vmul.f32 %v1520, %v378
      %v1594 = vsub.f32 %v1592, %v1593
      %1595 = vst [vmem:[%s7] sm:$0xff] %v1594
      // Predicated region
      $region53: #{_cnf_forward.1} parent=47 // pred_check
        %p1596 = pneg %p203
      $region54: #{_cnf_forward.1} parent=47 // pred_check_branch
        %1598 = sbr.rel (%p1596) target = $region56
      $region55: #{_cnf_forward.1} parent=47 // pred_region
        _
      $region56: #{_cnf_forward.1} parent=47 // pred_fallthru
        _
      // Predicated region
      $region57: #{_cnf_forward.1} parent=47 // pred_check
        %p1599 = pneg %p203
      $region58: #{_cnf_forward.1} parent=47 // pred_check_branch
        %1601 = sbr.rel (%p1599) target = $region60
      $region59: #{_cnf_forward.1} parent=47 // pred_region
        _
      $region60: #{_cnf_forward.1} parent=47 // pred_fallthru
        _
    $region48: #{_cnf_forward.1} parent=5 // pred_fallthru
      _
    %p1602 = scmp.le.s32.totalorder 2, %s13
    // Predicated region
    $region61: #{_cnf_forward.1} parent=5 // pred_check
      %p1603 = pneg %p1602
    $region62: #{_cnf_forward.1} parent=5 // pred_check_branch
      %1605 = sbr.rel (%p1603) target = $region64
    $region63: #{_cnf_forward.1} parent=5 // pred_region
      %s1606 = ssub.s32 %s13, 2
    $region64: #{_cnf_forward.1} parent=5 // pred_fallthru
      _
  $region6: #{_cnf_forward.1} parent=0 // loop_footer
    %s17 = sadd.s32 1, %s13
  $region7: #{_cnf_forward.1} parent=0 // loop_footer_branch
    %12 = sbr.rel target = $region3
  $region8: #{_cnf_forward.1} parent=0 // loop_exit
    _

</llo_original>
